<compile_context>
chip_gen: v7x
topology: tpu7x:2x2x1
jax: 0.10.0
libtpu: 0.0.40
codegen_flags: <defaults>
</compile_context>

<pallas_src>
import numpy as np
import jax
import jax.numpy as jnp
from jax.experimental import pallas as pl
from jax.experimental.pallas import tpu as pltpu


def _round_up(x, m):
    return (x + m - 1) // m * m


# --------------------------------------------------------------------------- #
# Kernel
# --------------------------------------------------------------------------- #
def _make_kernel(F, Npad, planes, Wtab, out_block_w, agg_type,
                 residual_method, dense_out, res_col):
    has_eps = residual_method in ('scale-add', 'scale-mult')
    K = F * Npad

    def kernel(*refs):
        if has_eps:
            x_ref, tab_ref, eps_ref, out_ref = refs
        else:
            x_ref, tab_ref, out_ref = refs

        x = x_ref[...]                                # [TB, F] int32 (pre-offset by f*Npad)

        # Fused one-hot over all features. Compares accumulate in f32 (v5e has no
        # bf16 VALU); single cast to bf16 right at the MXU feed. 0/1 exact in bf16.
        iota = jax.lax.broadcasted_iota(jnp.int32, (1, K), 1)
        oh = (x[:, 0:1] == iota).astype(jnp.float32)
        for f in range(1, F):                          # static unroll, F is small
            oh = oh + (x[:, f:f + 1] == iota).astype(jnp.float32)
        oh = oh.astype(jnp.bfloat16)                   # [TB, K]

        # Exact (3-plane) or fast (2-plane) gather: bf16 planes rebuild the f32 table.
        acc = jnp.dot(oh, tab_ref[0], preferred_element_type=jnp.float32)
        for p in range(1, planes):
            acc = acc + jnp.dot(oh, tab_ref[p], preferred_element_type=jnp.float32)

        if agg_type == 'mean':
            acc = acc * (1.0 / F)

        if residual_method is not None:
            # recover the raw last-column value (wrapper added (F-1)*Npad)
            xlast = (x[:, F - 1:F] - (F - 1) * Npad).astype(jnp.float32)   # [TB, 1]
            if residual_method == 'concat':
                unit = (jax.lax.broadcasted_iota(jnp.int32, (1, Wtab), 1)
                        == res_col).astype(jnp.float32)
                acc = acc + xlast * unit               # residual column fused, no masked store
            else:
                r = eps_ref[...] * xlast               # [1,Wtab]*[TB,1] -> [TB,Wtab]
                if residual_method == 'scale-add':
                    acc = acc + r
                else:                                  # 'scale-mult'
                    acc = acc * r

        if dense_out:
            out_ref[...] = acc                         # one full lane-aligned store
        else:
            out_ref[...] = acc[:, :out_block_w]        # exact-width store (small H)

    return kernel


# --------------------------------------------------------------------------- #
# One-time parameter packing (hoisted out of the forward path)
# --------------------------------------------------------------------------- #
def prepare_numeric_embedding(tables, eps=None, *, agg_type='concat',
                              residual_method=None, exact_gather=True):
    """tables: [F, N, H] f32 per-feature tables (zero-padded to a common N).
    eps: [F] f32 (only for 'scale-add'/'scale-mult')."""
    assert agg_type in ('concat', 'sum', 'mean')
    assert residual_method in (None, 'concat', 'scale-add', 'scale-mult')
    F, N, H = tables.shape

    Npad = _round_up(N, 128)                            # lane-aligned per-feature one-hot span
    agg_w = F * H if agg_type == 'concat' else H
    out_w = agg_w + (1 if residual_method == 'concat' else 0)
    W_pad = _round_up(out_w, 128)
    dense_out = W_pad < 2 * out_w                        # lane-dense only if padding < 2x
    Wtab = W_pad                                         # table kept lane-aligned for the MXU

    # Stacked (block-diagonal for 'concat') table in f32, then split into bf16 planes.
    t = np.asarray(tables, np.float32)
    big = np.zeros((F * Npad, Wtab), np.float32)
    for f in range(F):
        col = f * H if agg_type == 'concat' else 0
        big[f * Npad:f * Npad + N, col:col + H] = t[f]

    planes = 3 if exact_gather else 2
    plane_list, rem = [], jnp.asarray(big)
    for _ in range(planes):
        p = rem.astype(jnp.bfloat16)
        plane_list.append(p)
        rem = rem - p.astype(jnp.float32)
    tab = jnp.stack(plane_list, axis=0)                  # [planes, F*Npad, Wtab] bf16
    # TODO(synk): 3-plane split assumes normal floats; spot-check subnormal weights.

    eps_row = None
    if residual_method in ('scale-add', 'scale-mult'):
        e = np.asarray(eps, np.float32).reshape(-1)
        assert e.shape[0] == F
        assert F == agg_w or F == 1, (
            "scale-add/scale-mult requires eps (len F) to broadcast against the "
            "aggregated width (H == F for sum/mean, or F == 1)")
        row = np.zeros((1, Wtab), np.float32)
        row[0, :agg_w] = np.broadcast_to(e, (agg_w,))
        eps_row = jnp.asarray(row)

    return dict(tab=tab, eps_row=eps_row, F=F, H=H, Npad=Npad, Wtab=Wtab,
                planes=planes, agg_w=agg_w, out_w=out_w, dense_out=dense_out,
                agg_type=agg_type, residual_method=residual_method,
                col_offsets=jnp.arange(F, dtype=jnp.int32) * Npad)


# --------------------------------------------------------------------------- #
# Forward
# --------------------------------------------------------------------------- #
def numeric_embedding(params, X, *, batch_tile=512):
    """X: [B, F] integer indices."""
    F, H = params['F'], params['H']
    Npad, Wtab, planes = params['Npad'], params['Wtab'], params['planes']
    out_w, dense_out = params['out_w'], params['dense_out']
    agg_type, residual_method = params['agg_type'], params['residual_method']

    B, Fx = X.shape
    assert Fx == F

    # Batch tile: aim for >=4 grid steps, rows a multiple of 8, capped by batch_tile.
    TB = _round_up(max((B + 3) // 4, 64), 8)
    TB = min(TB, batch_tile, _round_up(B, 8))
    TB = max(TB, 8)
    Bpad = _round_up(B, TB)

    # Pre-offset feature indices so one fused one-hot hits the right table block.
    Xo = X.astype(jnp.int32) + params['col_offsets'][None, :]
    if Bpad != B:
        Xo = jnp.pad(Xo, ((0, Bpad - B), (0, 0)))

    out_block_w = Wtab if dense_out else out_w
    res_col = params['agg_w']                            # residual-concat column (== F*H)

    kernel = _make_kernel(F, Npad, planes, Wtab, out_block_w, agg_type,
                          residual_method, dense_out, res_col)

    in_specs = [
        pl.BlockSpec((TB, F), lambda i: (i, 0)),                      # pipelined index tile
        pl.BlockSpec((planes, F * Npad, Wtab), lambda i: (0, 0, 0),   # grid-invariant table,
                     pipeline_mode=pl.Buffered(1)),                   # single-buffered in VMEM
    ]
    args = [Xo, params['tab']]
    if params['eps_row'] is not None:
        in_specs.append(pl.BlockSpec((1, Wtab), lambda i: (0, 0)))
        args.append(params['eps_row'])

    # ---- generation-aware VMEM budget (v7x: 64 MiB/TC; v5e/v6e: 128 MiB) ---- #
    try:
        info = pltpu.get_tpu_info()
        vmem_cap = int(getattr(info, 'vmem_capacity_bytes', 0)) or (64 << 20)
    except Exception:
        vmem_cap = 64 << 20                               # conservative default
    cap = (vmem_cap * 3) // 4
    tab_bytes = planes * F * Npad * Wtab * 2              # single-buffered bf16 table
    io_bytes = 2 * TB * 128 * 4 + 2 * TB * _round_up(out_block_w, 128) * 4
    tmp_bytes = TB * F * Npad * 6 + TB * Wtab * 4         # one-hot f32+bf16, f32 acc
    if tab_bytes + io_bytes > cap:
        # TODO(synk): tile the table's output width over a second grid axis (or use an
        # HBM-resident table with scalar-prefetched DMA gather) when the stacked table
        # no longer fits single-buffered in VMEM (v7x: 64 MiB).
        raise ValueError("embedding table too large for the resident-VMEM kernel")
    vmem_limit = int(max(16 << 20, min(cap, tab_bytes + io_bytes + tmp_bytes + (4 << 20))))

    out = pl.pallas_call(
        kernel,
        out_shape=jax.ShapeDtypeStruct((Bpad, out_block_w), jnp.float32),
        grid=(Bpad // TB,),
        in_specs=in_specs,
        out_specs=pl.BlockSpec((TB, out_block_w), lambda i: (i, 0)),
        compiler_params=pltpu.CompilerParams(
            dimension_semantics=("parallel",),
            vmem_limit_bytes=vmem_limit),
    )(*args)

    if Bpad != B or out_block_w != out_w:
        out = out[:B, :out_w]
    # torch's .squeeze() after sum/mean: only the common H == 1 / no-residual case.
    if agg_type in ('sum', 'mean') and H == 1 and residual_method is None:
        out = out[:, 0]
    # TODO(synk): torch's .squeeze() also drops a size-1 batch dim and interacts oddly
    # with residuals when H == 1; those corner cases are not replicated.
    return out


# --------------------------------------------------------------------------- #
# Reference + test harness
# --------------------------------------------------------------------------- #
def ref_forward(X, tables, eps, agg_type, residual_method):
    X = np.asarray(X)
    T = np.asarray(tables)
    F = X.shape[1]
    hs = [T[f][X[:, f]] for f in range(F)]
    if agg_type == 'concat':
        h = np.concatenate(hs, axis=1)
    elif agg_type == 'sum':
        h = np.squeeze(np.stack(hs, axis=2).sum(axis=2))
    else:
        h = np.squeeze(np.stack(hs, axis=2).mean(axis=2))
    xlast = X[:, -1].astype(np.float32).reshape(-1, 1)
    if residual_method == 'concat':
        h = np.concatenate([h, xlast], axis=1)
    elif residual_method == 'scale-add':
        h = h + np.asarray(eps, np.float32) * xlast
    elif residual_method == 'scale-mult':
        h = h * np.asarray(eps, np.float32) * xlast
    return h.astype(np.float32)


def build_params(key, n_uniques, h_dim):
    N = max(n_uniques)
    tabs = []
    for n_unique in n_uniques:
        key, sub = jax.random.split(key)
        w = jax.random.normal(sub, (n_unique, h_dim), jnp.float32)
        w = jnp.pad(w, ((0, N - n_unique), (0, 0)))
        tabs.append(w)
    tables = jnp.stack(tabs, axis=0)                      # [F, N, H]
    eps = jnp.ones((len(n_uniques),), jnp.float32)        # matches th.ones(len(n_uniques))
    return tables, eps, key


def make_X(key, n_uniques, batch):
    cols = []
    for n_unique in n_uniques:
        key, sub = jax.random.split(key)
        cols.append(jax.random.randint(sub, (batch, 1), 0, n_unique, jnp.int32))
    return jnp.concatenate(cols, axis=1), key


if __name__ == "__main__":
    key = jax.random.PRNGKey(0)

    configs = [
        # (batch, n_uniques, h_dim, agg_type, residual_method)
        (512, [11, 7, 16], 32, 'concat', 'concat'),
        (512, [11, 7, 16], 32, 'mean', None),
        (512, [5, 9, 13], 3, 'sum', 'scale-add'),        # H == F: eps broadcast valid
        (50,  [4, 6, 8, 10], 4, 'sum', 'scale-mult'),    # ragged batch -> pad/slice path
    ]

    for B, n_uniques, h_dim, agg_type, residual_method in configs:
        tables, eps, key = build_params(key, n_uniques, h_dim)
        X, key = make_X(key, n_uniques, B)

        params = prepare_numeric_embedding(tables, eps, agg_type=agg_type,
                                           residual_method=residual_method)
        out = jax.block_until_ready(numeric_embedding(params, X))

        expect = ref_forward(X, tables, eps, agg_type, residual_method)
        np.testing.assert_allclose(np.asarray(out), expect, rtol=1e-5, atol=1e-5)

    # 2-plane fast-gather mode (approximate, ~2^-16 relative error)
    tables, eps, key = build_params(key, [11, 7, 16], 32)
    X, key = make_X(key, [11, 7, 16], 256)
    params = prepare_numeric_embedding(tables, eps, agg_type='concat',
                                       residual_method=None, exact_gather=False)
    out = jax.block_until_ready(numeric_embedding(params, X))
    expect = ref_forward(X, tables, eps, 'concat', None)
    np.testing.assert_allclose(np.asarray(out), expect, rtol=3e-3, atol=3e-3)

    print("KERNEL_OK")
</pallas_src>

<mosaic_0001>
module attributes {stable_mosaic.version = 11 : i64} {
  func.func @kernel(%arg0: i32, %arg1: memref<128x3xi32, #tpu.memory_space<vmem>>, %arg2: memref<3x384x128xbf16, #tpu.memory_space<vmem>>, %arg3: memref<128x128xf32, #tpu.memory_space<vmem>>) attributes {dimension_semantics = [#tpu.dimension_semantics<parallel>], iteration_bounds = array<i64: 4>, scalar_prefetch = 0 : i64, scratch_operands = 0 : i64, tpu.core_type = #tpu.core_type<tc>, window_params = [{transform_indices = @transform_0, window_bounds = array<i64: 128, 3>}, {pipeline_mode = #tpu.pipeline_mode<synchronous>, transform_indices = @transform_1, window_bounds = array<i64: 3, 384, 128>}, {transform_indices = @transform_2, window_bounds = array<i64: 128, 128>}]} {
    %c0 = arith.constant 0 : index
    %c0_0 = arith.constant 0 : index
    %0 = vector.load %arg1[%c0, %c0_0] : memref<128x3xi32, #tpu.memory_space<vmem>>, vector<128x3xi32>
    %1 = tpu.iota {dimensions = array<i32: 1>} : vector<1x384xi32>
    %2 = vector.extract_strided_slice %0 {offsets = [0, 0], sizes = [128, 1], strides = [1, 1]} : vector<128x3xi32> to vector<128x1xi32>
    %3 = vector.broadcast %2 : vector<128x1xi32> to vector<128x384xi32>
    %4 = vector.broadcast %1 : vector<1x384xi32> to vector<128x384xi32>
    %5 = arith.cmpi eq, %3, %4 : vector<128x384xi32>
    %6 = arith.extui %5 : vector<128x384xi1> to vector<128x384xi32>
    %7 = arith.sitofp %6 : vector<128x384xi32> to vector<128x384xf32>
    %8 = vector.extract_strided_slice %0 {offsets = [0, 1], sizes = [128, 1], strides = [1, 1]} : vector<128x3xi32> to vector<128x1xi32>
    %9 = vector.broadcast %8 : vector<128x1xi32> to vector<128x384xi32>
    %10 = vector.broadcast %1 : vector<1x384xi32> to vector<128x384xi32>
    %11 = arith.cmpi eq, %9, %10 : vector<128x384xi32>
    %12 = arith.extui %11 : vector<128x384xi1> to vector<128x384xi32>
    %13 = arith.sitofp %12 : vector<128x384xi32> to vector<128x384xf32>
    %14 = arith.addf %7, %13 : vector<128x384xf32>
    %15 = vector.extract_strided_slice %0 {offsets = [0, 2], sizes = [128, 1], strides = [1, 1]} : vector<128x3xi32> to vector<128x1xi32>
    %16 = vector.broadcast %15 : vector<128x1xi32> to vector<128x384xi32>
    %17 = vector.broadcast %1 : vector<1x384xi32> to vector<128x384xi32>
    %18 = arith.cmpi eq, %16, %17 : vector<128x384xi32>
    %19 = arith.extui %18 : vector<128x384xi1> to vector<128x384xi32>
    %20 = arith.sitofp %19 : vector<128x384xi32> to vector<128x384xf32>
    %21 = arith.addf %14, %20 : vector<128x384xf32>
    %22 = arith.truncf %21 : vector<128x384xf32> to vector<128x384xbf16>
    %c0_1 = arith.constant 0 : index
    %c0_2 = arith.constant 0 : index
    %c0_3 = arith.constant 0 : index
    %23 = vector.load %arg2[%c0_1, %c0_2, %c0_3] : memref<3x384x128xbf16, #tpu.memory_space<vmem>>, vector<1x384x128xbf16>
    %24 = vector.shape_cast %23 : vector<1x384x128xbf16> to vector<384x128xbf16>
    %cst = arith.constant dense<0.000000e+00> : vector<128x128xf32>
    %25 = tpu.matmul %22, %24, %cst {dimension_numbers = #tpu.dot_dimension_numbers<[1], [0], [0], [1], [0, 0, 1, 1], [], []>} : vector<128x384xbf16>, vector<384x128xbf16>, vector<128x128xf32> -> vector<128x128xf32>
    %c1 = arith.constant 1 : index
    %c0_4 = arith.constant 0 : index
    %c0_5 = arith.constant 0 : index
    %26 = vector.load %arg2[%c1, %c0_4, %c0_5] : memref<3x384x128xbf16, #tpu.memory_space<vmem>>, vector<1x384x128xbf16>
    %27 = vector.shape_cast %26 : vector<1x384x128xbf16> to vector<384x128xbf16>
    %cst_6 = arith.constant dense<0.000000e+00> : vector<128x128xf32>
    %28 = tpu.matmul %22, %27, %cst_6 {dimension_numbers = #tpu.dot_dimension_numbers<[1], [0], [0], [1], [0, 0, 1, 1], [], []>} : vector<128x384xbf16>, vector<384x128xbf16>, vector<128x128xf32> -> vector<128x128xf32>
    %29 = arith.addf %25, %28 : vector<128x128xf32>
    %c2 = arith.constant 2 : index
    %c0_7 = arith.constant 0 : index
    %c0_8 = arith.constant 0 : index
    %30 = vector.load %arg2[%c2, %c0_7, %c0_8] : memref<3x384x128xbf16, #tpu.memory_space<vmem>>, vector<1x384x128xbf16>
    %31 = vector.shape_cast %30 : vector<1x384x128xbf16> to vector<384x128xbf16>
    %cst_9 = arith.constant dense<0.000000e+00> : vector<128x128xf32>
    %32 = tpu.matmul %22, %31, %cst_9 {dimension_numbers = #tpu.dot_dimension_numbers<[1], [0], [0], [1], [0, 0, 1, 1], [], []>} : vector<128x384xbf16>, vector<384x128xbf16>, vector<128x128xf32> -> vector<128x128xf32>
    %33 = arith.addf %29, %32 : vector<128x128xf32>
    %34 = vector.extract_strided_slice %0 {offsets = [0, 2], sizes = [128, 1], strides = [1, 1]} : vector<128x3xi32> to vector<128x1xi32>
    %c256_i32 = arith.constant 256 : i32
    %35 = vector.broadcast %c256_i32 : i32 to vector<128x1xi32>
    %36 = arith.subi %34, %35 : vector<128x1xi32>
    %37 = arith.sitofp %36 : vector<128x1xi32> to vector<128x1xf32>
    %38 = tpu.iota {dimensions = array<i32: 1>} : vector<1x128xi32>
    %c96_i32 = arith.constant 96 : i32
    %39 = vector.broadcast %c96_i32 : i32 to vector<1x128xi32>
    %40 = arith.cmpi eq, %38, %39 : vector<1x128xi32>
    %41 = arith.extui %40 : vector<1x128xi1> to vector<1x128xi32>
    %42 = arith.sitofp %41 : vector<1x128xi32> to vector<1x128xf32>
    %43 = vector.broadcast %37 : vector<128x1xf32> to vector<128x128xf32>
    %44 = vector.broadcast %42 : vector<1x128xf32> to vector<128x128xf32>
    %45 = arith.mulf %43, %44 : vector<128x128xf32>
    %46 = arith.addf %33, %45 : vector<128x128xf32>
    %c0_10 = arith.constant 0 : index
    %c0_11 = arith.constant 0 : index
    %47 = vector.load %arg3[%c0_10, %c0_11] : memref<128x128xf32, #tpu.memory_space<vmem>>, vector<128x128xf32>
    tpu.vector_store %arg3[%c0_10, %c0_11], %46 {strides = array<i32>} : memref<128x128xf32, #tpu.memory_space<vmem>>, vector<128x128xf32>,
    return
  }
  func.func @transform_0(%arg0: i32) -> (i32, i32) {
    %c0_i32 = arith.constant 0 : i32
    %c0_i32_0 = arith.constant 0 : i32
    return %arg0, %c0_i32 : i32, i32
  }
  func.func @transform_1(%arg0: i32) -> (i32, i32, i32) {
    %c0_i32 = arith.constant 0 : i32
    %c0_i32_0 = arith.constant 0 : i32
    %c0_i32_1 = arith.constant 0 : i32
    %c0_i32_2 = arith.constant 0 : i32
    return %c0_i32, %c0_i32_0, %c0_i32_1 : i32, i32, i32
  }
  func.func @transform_2(%arg0: i32) -> (i32, i32) {
    %c0_i32 = arith.constant 0 : i32
    %c0_i32_0 = arith.constant 0 : i32
    return %arg0, %c0_i32 : i32, i32
  }
}

</mosaic_0001>

<llo_original>
// kernel: tpu_custom_call.1
$region0: #{tpu_custom_call.1}
  #allocation0 [shape = 'u32[]', space=smem, size = 0x4, offset = 0x4, fixed_abs, tag = 'smem constant byte address 0x4 - core index']
  #allocation1 [shape = 'u32[144,128]{1,0:T(1,128)}', space=vmem, size = 0x12000, scoped, tag = 'internal scratch']
  %s0 = inlined_call_operand.vmem [shape: s32[512,3], index: 0, kind: input, shape index: {}]
  %s1 = inlined_call_operand.hbm [shape: bf16[3,384,128], index: 1, kind: input, shape index: {}]
  %s2 = inlined_call_operand.hbm [shape: f32[512,128], index: 2, kind: output, shape index: {}]
  %s3 = sld [smem:[#allocation0]]
  $region45: #{tpu_custom_call.1} parent=0
    _
  %s5 = ssub.s32 1, %s3
  %s6 = scalar_select 0, %s5, %s3
  $region1: #{tpu_custom_call.1} parent=0
    #allocation2 [shape = 'u8[294912]{0}', space=vmem, size = 0x48000, scoped, tag = 'input window, operand 1, single buffered']
    #allocation3 [shape = 's32[2]{0}', space=sflag, size = 0x8, scoped, tag = 'scoped memory for tpu_custom_call.1']
    #allocation4 [shape = 's32[2]{0}', space=sflag, size = 0x8, scoped, tag = 'scoped memory for tpu_custom_call.1']
    #allocation5 [shape = 'u8[131072]{0}', space=vmem, size = 0x20000, scoped, tag = 'output window, operand 0']
    %7 = vsyncpa [#allocation3], 0
    %8 = vsyncpa [#allocation4], 0
    %s9 = scalar_lea.sflag [#allocation4], 1
    %10 = vsyncpa %s9, 0
    loop: start=0, step=1, limit=6
    $region2: #{tpu_custom_call.1} parent=1 // loop_pre_header
      _
    $region3: #{tpu_custom_call.1} parent=1 // loop_header
      %s12 = sphi 0, %s16
      %p13 = scmp.ge.s32.totalorder %s12, 6
      %s22 = sphi 0, %s24
      %s25 = sphi 0, %s22
      %s26 = sphi 0, %s25
      %s42 = sphi 0, %s26
      %s46 = sphi 0, %s46
      %s48 = sphi 0, %s46
      %s49 = sphi 0, %s48
      %s63 = sphi 0, %s49
      %s69 = sphi 0, %s71
      %s72 = sphi 0, %s69
      %s73 = sphi 0, %s72
      %s89 = sphi 0, %s73
    $region4: #{tpu_custom_call.1} parent=1 // loop_header_branch
      %15 = sbr.rel (%p13) target = $region8
    $region5: #{tpu_custom_call.1} parent=1 // loop_body
      %s17 = ssub.s32 %s12, 1
      %s18 = ssub.s32 %s12, 2
      %s19 = sadd.s32 %s12, 1
      %s20 = ssub.s32 %s12, %s19
      %p21 = scmp.eq.s32.totalorder %s20, 0
      %s23 = sadd.s32 %s22, 1
      %s24 = scalar_select %p21, %s22, %s23
      %p27 = pneg %p21
      %p28 = scmp.eq.s32.totalorder %s12, 3
      %p29 = por %p27, %p28
      %p30 = scmp.ne.s32.totalorder %s22, %s25
      %p31 = scmp.eq.s32.totalorder %s12, 0
      %p32 = por %p30, %p31
      %p33 = scmp.ne.s32.totalorder %s22, %s25
      %p34 = scmp.eq.s32.totalorder %s17, 3
      %p35 = por %p33, %p34
      %p36 = scmp.ne.s32.totalorder %s25, %s26
      %p37 = scmp.eq.s32.totalorder %s17, 0
      %p38 = por %p36, %p37
      %p39 = scmp.ne.s32.totalorder %s25, %s26
      %p40 = scmp.eq.s32.totalorder %s18, 3
      %p41 = por %p39, %p40
      %p43 = scmp.ne.s32.totalorder %s26, %s42
      %p44 = scmp.eq.s32.totalorder %s18, 0
      %p45 = por %p43, %p44
      %s47 = sadd.s32 %s46, 1
      %p50 = scmp.eq.s32.totalorder %s12, 3
      %p51 = scmp.ne.s32.totalorder %s46, %s48
      %p52 = scmp.eq.s32.totalorder %s12, 0
      %p53 = por %p51, %p52
      %p54 = scmp.ne.s32.totalorder %s46, %s48
      %p55 = scmp.eq.s32.totalorder %s17, 3
      %p56 = por %p54, %p55
      %p57 = scmp.ne.s32.totalorder %s48, %s49
      %p58 = scmp.eq.s32.totalorder %s17, 0
      %p59 = por %p57, %p58
      %p60 = scmp.ne.s32.totalorder %s48, %s49
      %p61 = scmp.eq.s32.totalorder %s18, 3
      %p62 = por %p60, %p61
      %p64 = scmp.ne.s32.totalorder %s49, %s63
      %p65 = scmp.eq.s32.totalorder %s18, 0
      %p66 = por %p64, %p65
      %s67 = ssub.s32 %s12, %s19
      %p68 = scmp.eq.s32.totalorder %s67, 0
      %s70 = sadd.s32 %s69, 1
      %s71 = scalar_select %p68, %s69, %s70
      %p74 = pneg %p68
      %p75 = scmp.eq.s32.totalorder %s12, 3
      %p76 = por %p74, %p75
      %p77 = scmp.ne.s32.totalorder %s69, %s72
      %p78 = scmp.eq.s32.totalorder %s12, 0
      %p79 = por %p77, %p78
      %p80 = scmp.ne.s32.totalorder %s69, %s72
      %p81 = scmp.eq.s32.totalorder %s17, 3
      %p82 = por %p80, %p81
      %p83 = scmp.ne.s32.totalorder %s72, %s73
      %p84 = scmp.eq.s32.totalorder %s17, 0
      %p85 = por %p83, %p84
      %p86 = scmp.ne.s32.totalorder %s72, %s73
      %p87 = scmp.eq.s32.totalorder %s18, 3
      %p88 = por %p86, %p87
      %p90 = scmp.ne.s32.totalorder %s73, %s89
      %p91 = scmp.eq.s32.totalorder %s18, 0
      %p92 = por %p90, %p91
      %p93 = scmp.le.s32.totalorder 1, %s12
      %p94 = scmp.lt.s32.totalorder %s12, 5
      %p95 = pnand %p93, %p94
      %p96 = pneg %p95
      // Predicated region
      $region9: #{tpu_custom_call.1} parent=5 // pred_check
        _
      $region10: #{tpu_custom_call.1} parent=5 // pred_check_branch
        %98 = sbr.rel (%p95) target = $region12
      $region11: #{tpu_custom_call.1} parent=5 // pred_region
        %s99 = ssub.s32 %s12, 1
        // Predicated region
        $region13: #{tpu_custom_call.1} parent=11 // pred_check
          %p100 = pneg %p59
        $region14: #{tpu_custom_call.1} parent=11 // pred_check_branch
          %102 = sbr.rel (%p100) target = $region16
        $region15: #{tpu_custom_call.1} parent=11 // pred_region
          %s104 = ssub.s32 9216, 9216
          %105 = vsyncadd [#allocation3], %s104
          %s106 = sshll.u32 [#allocation2], 4
          %s107 = int_to_ptr.vmem [resolvable:$true] %s106
          %112 = dma.hbm_to_vmem [thread:$0]  %s1, 9216, %s107, [#allocation3], 64, 64, 4
        $region16: #{tpu_custom_call.1} parent=11 // pred_fallthru
          _
      $region12: #{tpu_custom_call.1} parent=5 // pred_fallthru
        _
      %p113 = scmp.lt.s32.totalorder %s12, 4
      // Predicated region
      $region17: #{tpu_custom_call.1} parent=5 // pred_check
        %p114 = pneg %p113
      $region18: #{tpu_custom_call.1} parent=5 // pred_check_branch
        %116 = sbr.rel (%p114) target = $region20
      $region19: #{tpu_custom_call.1} parent=5 // pred_region
        // Predicated region
        $region21: #{tpu_custom_call.1} parent=19 // pred_check
          %p117 = pneg %p32
        $region22: #{tpu_custom_call.1} parent=19 // pred_check_branch
          %119 = sbr.rel (%p117) target = $region24
        $region23: #{tpu_custom_call.1} parent=19 // pred_region
          %s120 = smul.u32 16, %s12
          %p121 = scmp.lt.s32.totalorder %s120, 63
          %s122 = scalar_select %p121, %s120, 63
          %s123 = smul.addr %s122, 8
          %s124 = scalar_lea.vmem %s0, %s123
          %s125 = smul.u32 16, %s12
        $region24: #{tpu_custom_call.1} parent=19 // pred_fallthru
          _
      $region20: #{tpu_custom_call.1} parent=5 // pred_fallthru
        _
      %p126 = scmp.le.s32.totalorder 1, %s12
      %p127 = scmp.lt.s32.totalorder %s12, 5
      %p128 = pnand %p126, %p127
      %p129 = pneg %p128
      // Predicated region
      $region25: #{tpu_custom_call.1} parent=5 // pred_check
        _
      $region26: #{tpu_custom_call.1} parent=5 // pred_check_branch
        %131 = sbr.rel (%p128) target = $region28
      $region27: #{tpu_custom_call.1} parent=5 // pred_region
        %s132 = ssub.s32 %s12, 1
        // Predicated region
        $region29: #{tpu_custom_call.1} parent=27 // pred_check
          %p133 = pneg %p59
        $region30: #{tpu_custom_call.1} parent=27 // pred_check_branch
          %135 = sbr.rel (%p133) target = $region32
        $region31: #{tpu_custom_call.1} parent=27 // pred_region
          %136 = dma.done [#allocation3], 9216
        $region32: #{tpu_custom_call.1} parent=27 // pred_fallthru
          _
        %s137 = smul.u32 16, %s17
        %p138 = scmp.lt.s32.totalorder %s137, 63
        %s139 = scalar_select %p138, %s137, 63
        %s140 = smul.addr %s139, 8
        %s141 = scalar_lea.vmem %s0, %s140
        %p142 = pneg %p38
        %p143 = pneg %p35
        %p144 = pneg %p59
        %p145 = pneg %p56
        %p146 = pneg %p85
        %p147 = pneg %p82
        %s148 = sand.u32 %s72, 1
        %s149 = scalar_lea.sflag [#allocation4], %s148
        %s150 = sand.u32 %s72, 1
        %s151 = smul.addr %s150, 128
        %s152 = scalar_lea.vmem [#allocation5], %s151
        %s153 = smul.u32 16, %s17
        %p154 = scmp.lt.s32.totalorder %s153, 63
        %s155 = scalar_select %p154, %s153, 63
        %s156 = smul.addr %s155, 8
        %s157 = scalar_lea.vmem %s0, %s156
        %s158 = smul.u32 16, %s17
        %s159 = smul.u32 16, %s17
        %v161 = vld [vmem:[%s157] sm:$0xff]
        %v162 = vld [vmem:[%s157 + $0x8] sm:$0xff]
        %v163 = vld [vmem:[%s157 + $0x10] sm:$0xff]
        %v164 = vld [vmem:[%s157 + $0x18] sm:$0xff]
        %v165 = vld [vmem:[%s157 + $0x20] sm:$0xff]
        %v166 = vld [vmem:[%s157 + $0x28] sm:$0xff]
        %v167 = vld [vmem:[%s157 + $0x30] sm:$0xff]
        %v168 = vld [vmem:[%s157 + $0x38] sm:$0xff]
        %v169 = vld [vmem:[%s157 + $0x40] sm:$0xff]
        %v170 = vld [vmem:[%s157 + $0x48] sm:$0xff]
        %v171 = vld [vmem:[%s157 + $0x50] sm:$0xff]
        %v172 = vld [vmem:[%s157 + $0x58] sm:$0xff]
        %v173 = vld [vmem:[%s157 + $0x60] sm:$0xff]
        %v174 = vld [vmem:[%s157 + $0x68] sm:$0xff]
        %v175 = vld [vmem:[%s157 + $0x70] sm:$0xff]
        %v176 = vld [vmem:[%s157 + $0x78] sm:$0xff]
        %v177 = vlaneseq
        %v178 = vand.u32 %v177, 127
        %v179 = vadd.s32 %v178, 128
        %v180 = vadd.s32 %v178, 256
        %181 = vset.pattern.permute.xlu0 0
        %182 = vperm.xlu0 %181, %v161
        %v183 = vpop.permute.xlu0 %182
        %184 = vset.pattern.permute.xlu0 0
        %185 = vperm.xlu0 %184, %v162
        %v186 = vpop.permute.xlu0 %185
        %187 = vset.pattern.permute.xlu0 0
        %188 = vperm.xlu0 %187, %v163
        %v189 = vpop.permute.xlu0 %188
        %190 = vset.pattern.permute.xlu0 0
        %191 = vperm.xlu0 %190, %v164
        %v192 = vpop.permute.xlu0 %191
        %193 = vset.pattern.permute.xlu0 0
        %194 = vperm.xlu0 %193, %v165
        %v195 = vpop.permute.xlu0 %194
        %196 = vset.pattern.permute.xlu0 0
        %197 = vperm.xlu0 %196, %v166
        %v198 = vpop.permute.xlu0 %197
        %199 = vset.pattern.permute.xlu0 0
        %200 = vperm.xlu0 %199, %v167
        %v201 = vpop.permute.xlu0 %200
        %202 = vset.pattern.permute.xlu0 0
        %203 = vperm.xlu0 %202, %v168
        %v204 = vpop.permute.xlu0 %203
        %205 = vset.pattern.permute.xlu0 0
        %206 = vperm.xlu0 %205, %v169
        %v207 = vpop.permute.xlu0 %206
        %208 = vset.pattern.permute.xlu0 0
        %209 = vperm.xlu0 %208, %v170
        %v210 = vpop.permute.xlu0 %209
        %211 = vset.pattern.permute.xlu0 0
        %212 = vperm.xlu0 %211, %v171
        %v213 = vpop.permute.xlu0 %212
        %214 = vset.pattern.permute.xlu0 0
        %215 = vperm.xlu0 %214, %v172
        %v216 = vpop.permute.xlu0 %215
        %217 = vset.pattern.permute.xlu0 0
        %218 = vperm.xlu0 %217, %v173
        %v219 = vpop.permute.xlu0 %218
        %220 = vset.pattern.permute.xlu0 0
        %221 = vperm.xlu0 %220, %v174
        %v222 = vpop.permute.xlu0 %221
        %223 = vset.pattern.permute.xlu0 0
        %224 = vperm.xlu0 %223, %v175
        %v225 = vpop.permute.xlu0 %224
        %226 = vset.pattern.permute.xlu0 0
        %227 = vperm.xlu0 %226, %v176
        %v228 = vpop.permute.xlu0 %227
        %vm229 = vcmp.eq.s32.totalorder %v183, %v178
        %vm230 = vcmp.eq.s32.totalorder %v183, %v179
        %vm231 = vcmp.eq.s32.totalorder %v183, %v180
        %vm232 = vcmp.eq.s32.totalorder %v186, %v178
        %vm233 = vcmp.eq.s32.totalorder %v186, %v179
        %vm234 = vcmp.eq.s32.totalorder %v186, %v180
        %vm235 = vcmp.eq.s32.totalorder %v189, %v178
        %vm236 = vcmp.eq.s32.totalorder %v189, %v179
        %vm237 = vcmp.eq.s32.totalorder %v189, %v180
        %vm238 = vcmp.eq.s32.totalorder %v192, %v178
        %vm239 = vcmp.eq.s32.totalorder %v192, %v179
        %vm240 = vcmp.eq.s32.totalorder %v192, %v180
        %vm241 = vcmp.eq.s32.totalorder %v195, %v178
        %vm242 = vcmp.eq.s32.totalorder %v195, %v179
        %vm243 = vcmp.eq.s32.totalorder %v195, %v180
        %vm244 = vcmp.eq.s32.totalorder %v198, %v178
        %vm245 = vcmp.eq.s32.totalorder %v198, %v179
        %vm246 = vcmp.eq.s32.totalorder %v198, %v180
        %vm247 = vcmp.eq.s32.totalorder %v201, %v178
        %vm248 = vcmp.eq.s32.totalorder %v201, %v179
        %vm249 = vcmp.eq.s32.totalorder %v201, %v180
        %vm250 = vcmp.eq.s32.totalorder %v204, %v178
        %vm251 = vcmp.eq.s32.totalorder %v204, %v179
        %vm252 = vcmp.eq.s32.totalorder %v204, %v180
        %vm253 = vcmp.eq.s32.totalorder %v207, %v178
        %vm254 = vcmp.eq.s32.totalorder %v207, %v179
        %vm255 = vcmp.eq.s32.totalorder %v207, %v180
        %vm256 = vcmp.eq.s32.totalorder %v210, %v178
        %vm257 = vcmp.eq.s32.totalorder %v210, %v179
        %vm258 = vcmp.eq.s32.totalorder %v210, %v180
        %vm259 = vcmp.eq.s32.totalorder %v213, %v178
        %vm260 = vcmp.eq.s32.totalorder %v213, %v179
        %vm261 = vcmp.eq.s32.totalorder %v213, %v180
        %vm262 = vcmp.eq.s32.totalorder %v216, %v178
        %vm263 = vcmp.eq.s32.totalorder %v216, %v179
        %vm264 = vcmp.eq.s32.totalorder %v216, %v180
        %vm265 = vcmp.eq.s32.totalorder %v219, %v178
        %vm266 = vcmp.eq.s32.totalorder %v219, %v179
        %vm267 = vcmp.eq.s32.totalorder %v219, %v180
        %vm268 = vcmp.eq.s32.totalorder %v222, %v178
        %vm269 = vcmp.eq.s32.totalorder %v222, %v179
        %vm270 = vcmp.eq.s32.totalorder %v222, %v180
        %vm271 = vcmp.eq.s32.totalorder %v225, %v178
        %vm272 = vcmp.eq.s32.totalorder %v225, %v179
        %vm273 = vcmp.eq.s32.totalorder %v225, %v180
        %vm274 = vcmp.eq.s32.totalorder %v228, %v178
        %vm275 = vcmp.eq.s32.totalorder %v228, %v179
        %vm276 = vcmp.eq.s32.totalorder %v228, %v180
        %v277 = vsel %vm229, 1, 0
        %v278 = vsel %vm230, 1, 0
        %v279 = vsel %vm231, 1, 0
        %v280 = vsel %vm232, 1, 0
        %v281 = vsel %vm233, 1, 0
        %v282 = vsel %vm234, 1, 0
        %v283 = vsel %vm235, 1, 0
        %v284 = vsel %vm236, 1, 0
        %v285 = vsel %vm237, 1, 0
        %v286 = vsel %vm238, 1, 0
        %v287 = vsel %vm239, 1, 0
        %v288 = vsel %vm240, 1, 0
        %v289 = vsel %vm241, 1, 0
        %v290 = vsel %vm242, 1, 0
        %v291 = vsel %vm243, 1, 0
        %v292 = vsel %vm244, 1, 0
        %v293 = vsel %vm245, 1, 0
        %v294 = vsel %vm246, 1, 0
        %v295 = vsel %vm247, 1, 0
        %v296 = vsel %vm248, 1, 0
        %v297 = vsel %vm249, 1, 0
        %v298 = vsel %vm250, 1, 0
        %v299 = vsel %vm251, 1, 0
        %v300 = vsel %vm252, 1, 0
        %v301 = vsel %vm253, 1, 0
        %v302 = vsel %vm254, 1, 0
        %v303 = vsel %vm255, 1, 0
        %v304 = vsel %vm256, 1, 0
        %v305 = vsel %vm257, 1, 0
        %v306 = vsel %vm258, 1, 0
        %v307 = vsel %vm259, 1, 0
        %v308 = vsel %vm260, 1, 0
        %v309 = vsel %vm261, 1, 0
        %v310 = vsel %vm262, 1, 0
        %v311 = vsel %vm263, 1, 0
        %v312 = vsel %vm264, 1, 0
        %v313 = vsel %vm265, 1, 0
        %v314 = vsel %vm266, 1, 0
        %v315 = vsel %vm267, 1, 0
        %v316 = vsel %vm268, 1, 0
        %v317 = vsel %vm269, 1, 0
        %v318 = vsel %vm270, 1, 0
        %v319 = vsel %vm271, 1, 0
        %v320 = vsel %vm272, 1, 0
        %v321 = vsel %vm273, 1, 0
        %v322 = vsel %vm274, 1, 0
        %v323 = vsel %vm275, 1, 0
        %v324 = vsel %vm276, 1, 0
        %v325 = vcvt.s32.f32 %v277
        %v326 = vcvt.s32.f32 %v278
        %v327 = vcvt.s32.f32 %v279
        %v328 = vcvt.s32.f32 %v280
        %v329 = vcvt.s32.f32 %v281
        %v330 = vcvt.s32.f32 %v282
        %v331 = vcvt.s32.f32 %v283
        %v332 = vcvt.s32.f32 %v284
        %v333 = vcvt.s32.f32 %v285
        %v334 = vcvt.s32.f32 %v286
        %v335 = vcvt.s32.f32 %v287
        %v336 = vcvt.s32.f32 %v288
        %v337 = vcvt.s32.f32 %v289
        %v338 = vcvt.s32.f32 %v290
        %v339 = vcvt.s32.f32 %v291
        %v340 = vcvt.s32.f32 %v292
        %v341 = vcvt.s32.f32 %v293
        %v342 = vcvt.s32.f32 %v294
        %v343 = vcvt.s32.f32 %v295
        %v344 = vcvt.s32.f32 %v296
        %v345 = vcvt.s32.f32 %v297
        %v346 = vcvt.s32.f32 %v298
        %v347 = vcvt.s32.f32 %v299
        %v348 = vcvt.s32.f32 %v300
        %v349 = vcvt.s32.f32 %v301
        %v350 = vcvt.s32.f32 %v302
        %v351 = vcvt.s32.f32 %v303
        %v352 = vcvt.s32.f32 %v304
        %v353 = vcvt.s32.f32 %v305
        %v354 = vcvt.s32.f32 %v306
        %v355 = vcvt.s32.f32 %v307
        %v356 = vcvt.s32.f32 %v308
        %v357 = vcvt.s32.f32 %v309
        %v358 = vcvt.s32.f32 %v310
        %v359 = vcvt.s32.f32 %v311
        %v360 = vcvt.s32.f32 %v312
        %v361 = vcvt.s32.f32 %v313
        %v362 = vcvt.s32.f32 %v314
        %v363 = vcvt.s32.f32 %v315
        %v364 = vcvt.s32.f32 %v316
        %v365 = vcvt.s32.f32 %v317
        %v366 = vcvt.s32.f32 %v318
        %v367 = vcvt.s32.f32 %v319
        %v368 = vcvt.s32.f32 %v320
        %v369 = vcvt.s32.f32 %v321
        %v370 = vcvt.s32.f32 %v322
        %v371 = vcvt.s32.f32 %v323
        %v372 = vcvt.s32.f32 %v324
        %373 = vset.pattern.permute.xlu0 1
        %374 = vperm.xlu0 %373, %v161
        %v375 = vpop.permute.xlu0 %374
        %376 = vset.pattern.permute.xlu0 1
        %377 = vperm.xlu0 %376, %v162
        %v378 = vpop.permute.xlu0 %377
        %379 = vset.pattern.permute.xlu0 1
        %380 = vperm.xlu0 %379, %v163
        %v381 = vpop.permute.xlu0 %380
        %382 = vset.pattern.permute.xlu0 1
        %383 = vperm.xlu0 %382, %v164
        %v384 = vpop.permute.xlu0 %383
        %385 = vset.pattern.permute.xlu0 1
        %386 = vperm.xlu0 %385, %v165
        %v387 = vpop.permute.xlu0 %386
        %388 = vset.pattern.permute.xlu0 1
        %389 = vperm.xlu0 %388, %v166
        %v390 = vpop.permute.xlu0 %389
        %391 = vset.pattern.permute.xlu0 1
        %392 = vperm.xlu0 %391, %v167
        %v393 = vpop.permute.xlu0 %392
        %394 = vset.pattern.permute.xlu0 1
        %395 = vperm.xlu0 %394, %v168
        %v396 = vpop.permute.xlu0 %395
        %397 = vset.pattern.permute.xlu0 1
        %398 = vperm.xlu0 %397, %v169
        %v399 = vpop.permute.xlu0 %398
        %400 = vset.pattern.permute.xlu0 1
        %401 = vperm.xlu0 %400, %v170
        %v402 = vpop.permute.xlu0 %401
        %403 = vset.pattern.permute.xlu0 1
        %404 = vperm.xlu0 %403, %v171
        %v405 = vpop.permute.xlu0 %404
        %406 = vset.pattern.permute.xlu0 1
        %407 = vperm.xlu0 %406, %v172
        %v408 = vpop.permute.xlu0 %407
        %409 = vset.pattern.permute.xlu0 1
        %410 = vperm.xlu0 %409, %v173
        %v411 = vpop.permute.xlu0 %410
        %412 = vset.pattern.permute.xlu0 1
        %413 = vperm.xlu0 %412, %v174
        %v414 = vpop.permute.xlu0 %413
        %415 = vset.pattern.permute.xlu0 1
        %416 = vperm.xlu0 %415, %v175
        %v417 = vpop.permute.xlu0 %416
        %418 = vset.pattern.permute.xlu0 1
        %419 = vperm.xlu0 %418, %v176
        %v420 = vpop.permute.xlu0 %419
        %vm421 = vcmp.eq.s32.totalorder %v375, %v178
        %vm422 = vcmp.eq.s32.totalorder %v375, %v179
        %vm423 = vcmp.eq.s32.totalorder %v375, %v180
        %vm424 = vcmp.eq.s32.totalorder %v378, %v178
        %vm425 = vcmp.eq.s32.totalorder %v378, %v179
        %vm426 = vcmp.eq.s32.totalorder %v378, %v180
        %vm427 = vcmp.eq.s32.totalorder %v381, %v178
        %vm428 = vcmp.eq.s32.totalorder %v381, %v179
        %vm429 = vcmp.eq.s32.totalorder %v381, %v180
        %vm430 = vcmp.eq.s32.totalorder %v384, %v178
        %vm431 = vcmp.eq.s32.totalorder %v384, %v179
        %vm432 = vcmp.eq.s32.totalorder %v384, %v180
        %vm433 = vcmp.eq.s32.totalorder %v387, %v178
        %vm434 = vcmp.eq.s32.totalorder %v387, %v179
        %vm435 = vcmp.eq.s32.totalorder %v387, %v180
        %vm436 = vcmp.eq.s32.totalorder %v390, %v178
        %vm437 = vcmp.eq.s32.totalorder %v390, %v179
        %vm438 = vcmp.eq.s32.totalorder %v390, %v180
        %vm439 = vcmp.eq.s32.totalorder %v393, %v178
        %vm440 = vcmp.eq.s32.totalorder %v393, %v179
        %vm441 = vcmp.eq.s32.totalorder %v393, %v180
        %vm442 = vcmp.eq.s32.totalorder %v396, %v178
        %vm443 = vcmp.eq.s32.totalorder %v396, %v179
        %vm444 = vcmp.eq.s32.totalorder %v396, %v180
        %vm445 = vcmp.eq.s32.totalorder %v399, %v178
        %vm446 = vcmp.eq.s32.totalorder %v399, %v179
        %vm447 = vcmp.eq.s32.totalorder %v399, %v180
        %vm448 = vcmp.eq.s32.totalorder %v402, %v178
        %vm449 = vcmp.eq.s32.totalorder %v402, %v179
        %vm450 = vcmp.eq.s32.totalorder %v402, %v180
        %vm451 = vcmp.eq.s32.totalorder %v405, %v178
        %vm452 = vcmp.eq.s32.totalorder %v405, %v179
        %vm453 = vcmp.eq.s32.totalorder %v405, %v180
        %vm454 = vcmp.eq.s32.totalorder %v408, %v178
        %vm455 = vcmp.eq.s32.totalorder %v408, %v179
        %vm456 = vcmp.eq.s32.totalorder %v408, %v180
        %vm457 = vcmp.eq.s32.totalorder %v411, %v178
        %vm458 = vcmp.eq.s32.totalorder %v411, %v179
        %vm459 = vcmp.eq.s32.totalorder %v411, %v180
        %vm460 = vcmp.eq.s32.totalorder %v414, %v178
        %vm461 = vcmp.eq.s32.totalorder %v414, %v179
        %vm462 = vcmp.eq.s32.totalorder %v414, %v180
        %vm463 = vcmp.eq.s32.totalorder %v417, %v178
        %vm464 = vcmp.eq.s32.totalorder %v417, %v179
        %vm465 = vcmp.eq.s32.totalorder %v417, %v180
        %vm466 = vcmp.eq.s32.totalorder %v420, %v178
        %vm467 = vcmp.eq.s32.totalorder %v420, %v179
        %vm468 = vcmp.eq.s32.totalorder %v420, %v180
        %v469 = vsel %vm421, 1, 0
        %v470 = vsel %vm422, 1, 0
        %v471 = vsel %vm423, 1, 0
        %v472 = vsel %vm424, 1, 0
        %v473 = vsel %vm425, 1, 0
        %v474 = vsel %vm426, 1, 0
        %v475 = vsel %vm427, 1, 0
        %v476 = vsel %vm428, 1, 0
        %v477 = vsel %vm429, 1, 0
        %v478 = vsel %vm430, 1, 0
        %v479 = vsel %vm431, 1, 0
        %v480 = vsel %vm432, 1, 0
        %v481 = vsel %vm433, 1, 0
        %v482 = vsel %vm434, 1, 0
        %v483 = vsel %vm435, 1, 0
        %v484 = vsel %vm436, 1, 0
        %v485 = vsel %vm437, 1, 0
        %v486 = vsel %vm438, 1, 0
        %v487 = vsel %vm439, 1, 0
        %v488 = vsel %vm440, 1, 0
        %v489 = vsel %vm441, 1, 0
        %v490 = vsel %vm442, 1, 0
        %v491 = vsel %vm443, 1, 0
        %v492 = vsel %vm444, 1, 0
        %v493 = vsel %vm445, 1, 0
        %v494 = vsel %vm446, 1, 0
        %v495 = vsel %vm447, 1, 0
        %v496 = vsel %vm448, 1, 0
        %v497 = vsel %vm449, 1, 0
        %v498 = vsel %vm450, 1, 0
        %v499 = vsel %vm451, 1, 0
        %v500 = vsel %vm452, 1, 0
        %v501 = vsel %vm453, 1, 0
        %v502 = vsel %vm454, 1, 0
        %v503 = vsel %vm455, 1, 0
        %v504 = vsel %vm456, 1, 0
        %v505 = vsel %vm457, 1, 0
        %v506 = vsel %vm458, 1, 0
        %v507 = vsel %vm459, 1, 0
        %v508 = vsel %vm460, 1, 0
        %v509 = vsel %vm461, 1, 0
        %v510 = vsel %vm462, 1, 0
        %v511 = vsel %vm463, 1, 0
        %v512 = vsel %vm464, 1, 0
        %v513 = vsel %vm465, 1, 0
        %v514 = vsel %vm466, 1, 0
        %v515 = vsel %vm467, 1, 0
        %v516 = vsel %vm468, 1, 0
        %v517 = vcvt.s32.f32 %v469
        %v518 = vcvt.s32.f32 %v470
        %v519 = vcvt.s32.f32 %v471
        %v520 = vcvt.s32.f32 %v472
        %v521 = vcvt.s32.f32 %v473
        %v522 = vcvt.s32.f32 %v474
        %v523 = vcvt.s32.f32 %v475
        %v524 = vcvt.s32.f32 %v476
        %v525 = vcvt.s32.f32 %v477
        %v526 = vcvt.s32.f32 %v478
        %v527 = vcvt.s32.f32 %v479
        %v528 = vcvt.s32.f32 %v480
        %v529 = vcvt.s32.f32 %v481
        %v530 = vcvt.s32.f32 %v482
        %v531 = vcvt.s32.f32 %v483
        %v532 = vcvt.s32.f32 %v484
        %v533 = vcvt.s32.f32 %v485
        %v534 = vcvt.s32.f32 %v486
        %v535 = vcvt.s32.f32 %v487
        %v536 = vcvt.s32.f32 %v488
        %v537 = vcvt.s32.f32 %v489
        %v538 = vcvt.s32.f32 %v490
        %v539 = vcvt.s32.f32 %v491
        %v540 = vcvt.s32.f32 %v492
        %v541 = vcvt.s32.f32 %v493
        %v542 = vcvt.s32.f32 %v494
        %v543 = vcvt.s32.f32 %v495
        %v544 = vcvt.s32.f32 %v496
        %v545 = vcvt.s32.f32 %v497
        %v546 = vcvt.s32.f32 %v498
        %v547 = vcvt.s32.f32 %v499
        %v548 = vcvt.s32.f32 %v500
        %v549 = vcvt.s32.f32 %v501
        %v550 = vcvt.s32.f32 %v502
        %v551 = vcvt.s32.f32 %v503
        %v552 = vcvt.s32.f32 %v504
        %v553 = vcvt.s32.f32 %v505
        %v554 = vcvt.s32.f32 %v506
        %v555 = vcvt.s32.f32 %v507
        %v556 = vcvt.s32.f32 %v508
        %v557 = vcvt.s32.f32 %v509
        %v558 = vcvt.s32.f32 %v510
        %v559 = vcvt.s32.f32 %v511
        %v560 = vcvt.s32.f32 %v512
        %v561 = vcvt.s32.f32 %v513
        %v562 = vcvt.s32.f32 %v514
        %v563 = vcvt.s32.f32 %v515
        %v564 = vcvt.s32.f32 %v516
        %v565 = vadd.f32 %v325, %v517
        %v566 = vadd.f32 %v326, %v518
        %v567 = vadd.f32 %v327, %v519
        %v568 = vadd.f32 %v328, %v520
        %v569 = vadd.f32 %v329, %v521
        %v570 = vadd.f32 %v330, %v522
        %v571 = vadd.f32 %v331, %v523
        %v572 = vadd.f32 %v332, %v524
        %v573 = vadd.f32 %v333, %v525
        %v574 = vadd.f32 %v334, %v526
        %v575 = vadd.f32 %v335, %v527
        %v576 = vadd.f32 %v336, %v528
        %v577 = vadd.f32 %v337, %v529
        %v578 = vadd.f32 %v338, %v530
        %v579 = vadd.f32 %v339, %v531
        %v580 = vadd.f32 %v340, %v532
        %v581 = vadd.f32 %v341, %v533
        %v582 = vadd.f32 %v342, %v534
        %v583 = vadd.f32 %v343, %v535
        %v584 = vadd.f32 %v344, %v536
        %v585 = vadd.f32 %v345, %v537
        %v586 = vadd.f32 %v346, %v538
        %v587 = vadd.f32 %v347, %v539
        %v588 = vadd.f32 %v348, %v540
        %v589 = vadd.f32 %v349, %v541
        %v590 = vadd.f32 %v350, %v542
        %v591 = vadd.f32 %v351, %v543
        %v592 = vadd.f32 %v352, %v544
        %v593 = vadd.f32 %v353, %v545
        %v594 = vadd.f32 %v354, %v546
        %v595 = vadd.f32 %v355, %v547
        %v596 = vadd.f32 %v356, %v548
        %v597 = vadd.f32 %v357, %v549
        %v598 = vadd.f32 %v358, %v550
        %v599 = vadd.f32 %v359, %v551
        %v600 = vadd.f32 %v360, %v552
        %v601 = vadd.f32 %v361, %v553
        %v602 = vadd.f32 %v362, %v554
        %v603 = vadd.f32 %v363, %v555
        %v604 = vadd.f32 %v364, %v556
        %v605 = vadd.f32 %v365, %v557
        %v606 = vadd.f32 %v366, %v558
        %v607 = vadd.f32 %v367, %v559
        %v608 = vadd.f32 %v368, %v560
        %v609 = vadd.f32 %v369, %v561
        %v610 = vadd.f32 %v370, %v562
        %v611 = vadd.f32 %v371, %v563
        %v612 = vadd.f32 %v372, %v564
        %613 = vset.pattern.permute.xlu0 2
        %614 = vperm.xlu0 %613, %v161
        %v615 = vpop.permute.xlu0 %614
        %616 = vset.pattern.permute.xlu0 2
        %617 = vperm.xlu0 %616, %v162
        %v618 = vpop.permute.xlu0 %617
        %619 = vset.pattern.permute.xlu0 2
        %620 = vperm.xlu0 %619, %v163
        %v621 = vpop.permute.xlu0 %620
        %622 = vset.pattern.permute.xlu0 2
        %623 = vperm.xlu0 %622, %v164
        %v624 = vpop.permute.xlu0 %623
        %625 = vset.pattern.permute.xlu0 2
        %626 = vperm.xlu0 %625, %v165
        %v627 = vpop.permute.xlu0 %626
        %628 = vset.pattern.permute.xlu0 2
        %629 = vperm.xlu0 %628, %v166
        %v630 = vpop.permute.xlu0 %629
        %631 = vset.pattern.permute.xlu0 2
        %632 = vperm.xlu0 %631, %v167
        %v633 = vpop.permute.xlu0 %632
        %634 = vset.pattern.permute.xlu0 2
        %635 = vperm.xlu0 %634, %v168
        %v636 = vpop.permute.xlu0 %635
        %637 = vset.pattern.permute.xlu0 2
        %638 = vperm.xlu0 %637, %v169
        %v639 = vpop.permute.xlu0 %638
        %640 = vset.pattern.permute.xlu0 2
        %641 = vperm.xlu0 %640, %v170
        %v642 = vpop.permute.xlu0 %641
        %643 = vset.pattern.permute.xlu0 2
        %644 = vperm.xlu0 %643, %v171
        %v645 = vpop.permute.xlu0 %644
        %646 = vset.pattern.permute.xlu0 2
        %647 = vperm.xlu0 %646, %v172
        %v648 = vpop.permute.xlu0 %647
        %649 = vset.pattern.permute.xlu0 2
        %650 = vperm.xlu0 %649, %v173
        %v651 = vpop.permute.xlu0 %650
        %652 = vset.pattern.permute.xlu0 2
        %653 = vperm.xlu0 %652, %v174
        %v654 = vpop.permute.xlu0 %653
        %655 = vset.pattern.permute.xlu0 2
        %656 = vperm.xlu0 %655, %v175
        %v657 = vpop.permute.xlu0 %656
        %658 = vset.pattern.permute.xlu0 2
        %659 = vperm.xlu0 %658, %v176
        %v660 = vpop.permute.xlu0 %659
        %vm661 = vcmp.eq.s32.totalorder %v615, %v178
        %vm662 = vcmp.eq.s32.totalorder %v615, %v179
        %vm663 = vcmp.eq.s32.totalorder %v615, %v180
        %vm664 = vcmp.eq.s32.totalorder %v618, %v178
        %vm665 = vcmp.eq.s32.totalorder %v618, %v179
        %vm666 = vcmp.eq.s32.totalorder %v618, %v180
        %vm667 = vcmp.eq.s32.totalorder %v621, %v178
        %vm668 = vcmp.eq.s32.totalorder %v621, %v179
        %vm669 = vcmp.eq.s32.totalorder %v621, %v180
        %vm670 = vcmp.eq.s32.totalorder %v624, %v178
        %vm671 = vcmp.eq.s32.totalorder %v624, %v179
        %vm672 = vcmp.eq.s32.totalorder %v624, %v180
        %vm673 = vcmp.eq.s32.totalorder %v627, %v178
        %vm674 = vcmp.eq.s32.totalorder %v627, %v179
        %vm675 = vcmp.eq.s32.totalorder %v627, %v180
        %vm676 = vcmp.eq.s32.totalorder %v630, %v178
        %vm677 = vcmp.eq.s32.totalorder %v630, %v179
        %vm678 = vcmp.eq.s32.totalorder %v630, %v180
        %vm679 = vcmp.eq.s32.totalorder %v633, %v178
        %vm680 = vcmp.eq.s32.totalorder %v633, %v179
        %vm681 = vcmp.eq.s32.totalorder %v633, %v180
        %vm682 = vcmp.eq.s32.totalorder %v636, %v178
        %vm683 = vcmp.eq.s32.totalorder %v636, %v179
        %vm684 = vcmp.eq.s32.totalorder %v636, %v180
        %vm685 = vcmp.eq.s32.totalorder %v639, %v178
        %vm686 = vcmp.eq.s32.totalorder %v639, %v179
        %vm687 = vcmp.eq.s32.totalorder %v639, %v180
        %vm688 = vcmp.eq.s32.totalorder %v642, %v178
        %vm689 = vcmp.eq.s32.totalorder %v642, %v179
        %vm690 = vcmp.eq.s32.totalorder %v642, %v180
        %vm691 = vcmp.eq.s32.totalorder %v645, %v178
        %vm692 = vcmp.eq.s32.totalorder %v645, %v179
        %vm693 = vcmp.eq.s32.totalorder %v645, %v180
        %vm694 = vcmp.eq.s32.totalorder %v648, %v178
        %vm695 = vcmp.eq.s32.totalorder %v648, %v179
        %vm696 = vcmp.eq.s32.totalorder %v648, %v180
        %vm697 = vcmp.eq.s32.totalorder %v651, %v178
        %vm698 = vcmp.eq.s32.totalorder %v651, %v179
        %vm699 = vcmp.eq.s32.totalorder %v651, %v180
        %vm700 = vcmp.eq.s32.totalorder %v654, %v178
        %vm701 = vcmp.eq.s32.totalorder %v654, %v179
        %vm702 = vcmp.eq.s32.totalorder %v654, %v180
        %vm703 = vcmp.eq.s32.totalorder %v657, %v178
        %vm704 = vcmp.eq.s32.totalorder %v657, %v179
        %vm705 = vcmp.eq.s32.totalorder %v657, %v180
        %vm706 = vcmp.eq.s32.totalorder %v660, %v178
        %vm707 = vcmp.eq.s32.totalorder %v660, %v179
        %vm708 = vcmp.eq.s32.totalorder %v660, %v180
        %v709 = vsel %vm661, 1, 0
        %v710 = vsel %vm662, 1, 0
        %v711 = vsel %vm663, 1, 0
        %v712 = vsel %vm664, 1, 0
        %v713 = vsel %vm665, 1, 0
        %v714 = vsel %vm666, 1, 0
        %v715 = vsel %vm667, 1, 0
        %v716 = vsel %vm668, 1, 0
        %v717 = vsel %vm669, 1, 0
        %v718 = vsel %vm670, 1, 0
        %v719 = vsel %vm671, 1, 0
        %v720 = vsel %vm672, 1, 0
        %v721 = vsel %vm673, 1, 0
        %v722 = vsel %vm674, 1, 0
        %v723 = vsel %vm675, 1, 0
        %v724 = vsel %vm676, 1, 0
        %v725 = vsel %vm677, 1, 0
        %v726 = vsel %vm678, 1, 0
        %v727 = vsel %vm679, 1, 0
        %v728 = vsel %vm680, 1, 0
        %v729 = vsel %vm681, 1, 0
        %v730 = vsel %vm682, 1, 0
        %v731 = vsel %vm683, 1, 0
        %v732 = vsel %vm684, 1, 0
        %v733 = vsel %vm685, 1, 0
        %v734 = vsel %vm686, 1, 0
        %v735 = vsel %vm687, 1, 0
        %v736 = vsel %vm688, 1, 0
        %v737 = vsel %vm689, 1, 0
        %v738 = vsel %vm690, 1, 0
        %v739 = vsel %vm691, 1, 0
        %v740 = vsel %vm692, 1, 0
        %v741 = vsel %vm693, 1, 0
        %v742 = vsel %vm694, 1, 0
        %v743 = vsel %vm695, 1, 0
        %v744 = vsel %vm696, 1, 0
        %v745 = vsel %vm697, 1, 0
        %v746 = vsel %vm698, 1, 0
        %v747 = vsel %vm699, 1, 0
        %v748 = vsel %vm700, 1, 0
        %v749 = vsel %vm701, 1, 0
        %v750 = vsel %vm702, 1, 0
        %v751 = vsel %vm703, 1, 0
        %v752 = vsel %vm704, 1, 0
        %v753 = vsel %vm705, 1, 0
        %v754 = vsel %vm706, 1, 0
        %v755 = vsel %vm707, 1, 0
        %v756 = vsel %vm708, 1, 0
        %v757 = vcvt.s32.f32 %v709
        %v758 = vcvt.s32.f32 %v710
        %v759 = vcvt.s32.f32 %v711
        %v760 = vcvt.s32.f32 %v712
        %v761 = vcvt.s32.f32 %v713
        %v762 = vcvt.s32.f32 %v714
        %v763 = vcvt.s32.f32 %v715
        %v764 = vcvt.s32.f32 %v716
        %v765 = vcvt.s32.f32 %v717
        %v766 = vcvt.s32.f32 %v718
        %v767 = vcvt.s32.f32 %v719
        %v768 = vcvt.s32.f32 %v720
        %v769 = vcvt.s32.f32 %v721
        %v770 = vcvt.s32.f32 %v722
        %v771 = vcvt.s32.f32 %v723
        %v772 = vcvt.s32.f32 %v724
        %v773 = vcvt.s32.f32 %v725
        %v774 = vcvt.s32.f32 %v726
        %v775 = vcvt.s32.f32 %v727
        %v776 = vcvt.s32.f32 %v728
        %v777 = vcvt.s32.f32 %v729
        %v778 = vcvt.s32.f32 %v730
        %v779 = vcvt.s32.f32 %v731
        %v780 = vcvt.s32.f32 %v732
        %v781 = vcvt.s32.f32 %v733
        %v782 = vcvt.s32.f32 %v734
        %v783 = vcvt.s32.f32 %v735
        %v784 = vcvt.s32.f32 %v736
        %v785 = vcvt.s32.f32 %v737
        %v786 = vcvt.s32.f32 %v738
        %v787 = vcvt.s32.f32 %v739
        %v788 = vcvt.s32.f32 %v740
        %v789 = vcvt.s32.f32 %v741
        %v790 = vcvt.s32.f32 %v742
        %v791 = vcvt.s32.f32 %v743
        %v792 = vcvt.s32.f32 %v744
        %v793 = vcvt.s32.f32 %v745
        %v794 = vcvt.s32.f32 %v746
        %v795 = vcvt.s32.f32 %v747
        %v796 = vcvt.s32.f32 %v748
        %v797 = vcvt.s32.f32 %v749
        %v798 = vcvt.s32.f32 %v750
        %v799 = vcvt.s32.f32 %v751
        %v800 = vcvt.s32.f32 %v752
        %v801 = vcvt.s32.f32 %v753
        %v802 = vcvt.s32.f32 %v754
        %v803 = vcvt.s32.f32 %v755
        %v804 = vcvt.s32.f32 %v756
        %v805 = vadd.f32 %v565, %v757
        %v806 = vadd.f32 %v566, %v758
        %v807 = vadd.f32 %v567, %v759
        %v808 = vadd.f32 %v568, %v760
        %v809 = vadd.f32 %v569, %v761
        %v810 = vadd.f32 %v570, %v762
        %v811 = vadd.f32 %v571, %v763
        %v812 = vadd.f32 %v572, %v764
        %v813 = vadd.f32 %v573, %v765
        %v814 = vadd.f32 %v574, %v766
        %v815 = vadd.f32 %v575, %v767
        %v816 = vadd.f32 %v576, %v768
        %v817 = vadd.f32 %v577, %v769
        %v818 = vadd.f32 %v578, %v770
        %v819 = vadd.f32 %v579, %v771
        %v820 = vadd.f32 %v580, %v772
        %v821 = vadd.f32 %v581, %v773
        %v822 = vadd.f32 %v582, %v774
        %v823 = vadd.f32 %v583, %v775
        %v824 = vadd.f32 %v584, %v776
        %v825 = vadd.f32 %v585, %v777
        %v826 = vadd.f32 %v586, %v778
        %v827 = vadd.f32 %v587, %v779
        %v828 = vadd.f32 %v588, %v780
        %v829 = vadd.f32 %v589, %v781
        %v830 = vadd.f32 %v590, %v782
        %v831 = vadd.f32 %v591, %v783
        %v832 = vadd.f32 %v592, %v784
        %v833 = vadd.f32 %v593, %v785
        %v834 = vadd.f32 %v594, %v786
        %v835 = vadd.f32 %v595, %v787
        %v836 = vadd.f32 %v596, %v788
        %v837 = vadd.f32 %v597, %v789
        %v838 = vadd.f32 %v598, %v790
        %v839 = vadd.f32 %v599, %v791
        %v840 = vadd.f32 %v600, %v792
        %v841 = vadd.f32 %v601, %v793
        %v842 = vadd.f32 %v602, %v794
        %v843 = vadd.f32 %v603, %v795
        %v844 = vadd.f32 %v604, %v796
        %v845 = vadd.f32 %v605, %v797
        %v846 = vadd.f32 %v606, %v798
        %v847 = vadd.f32 %v607, %v799
        %v848 = vadd.f32 %v608, %v800
        %v849 = vadd.f32 %v609, %v801
        %v850 = vadd.f32 %v610, %v802
        %v851 = vadd.f32 %v611, %v803
        %v852 = vadd.f32 %v612, %v804
        %v853 = vpack.c.bf16 %v808, %v805
        %v854 = vpack.c.bf16 %v809, %v806
        %v855 = vpack.c.bf16 %v810, %v807
        %v856 = vpack.c.bf16 %v814, %v811
        %v857 = vpack.c.bf16 %v815, %v812
        %v858 = vpack.c.bf16 %v816, %v813
        %v859 = vpack.c.bf16 %v820, %v817
        %v860 = vpack.c.bf16 %v821, %v818
        %v861 = vpack.c.bf16 %v822, %v819
        %v862 = vpack.c.bf16 %v826, %v823
        %v863 = vpack.c.bf16 %v827, %v824
        %v864 = vpack.c.bf16 %v828, %v825
        %v865 = vpack.c.bf16 %v832, %v829
        %v866 = vpack.c.bf16 %v833, %v830
        %v867 = vpack.c.bf16 %v834, %v831
        %v868 = vpack.c.bf16 %v838, %v835
        %v869 = vpack.c.bf16 %v839, %v836
        %v870 = vpack.c.bf16 %v840, %v837
        %v871 = vpack.c.bf16 %v844, %v841
        %v872 = vpack.c.bf16 %v845, %v842
        %v873 = vpack.c.bf16 %v846, %v843
        %v874 = vpack.c.bf16 %v850, %v847
        %v875 = vpack.c.bf16 %v851, %v848
        %v876 = vpack.c.bf16 %v852, %v849
        %v877 = vld [vmem:[#allocation2] sm:$0xf]
        %v878 = vld [vmem:[#allocation2 + $0x4] sm:$0xf]
        %v879 = vld [vmem:[#allocation2 + $0x8] sm:$0xf]
        %v880 = vld [vmem:[#allocation2 + $0xc] sm:$0xf]
        %v881 = vld [vmem:[#allocation2 + $0x10] sm:$0xf]
        %v882 = vld [vmem:[#allocation2 + $0x14] sm:$0xf]
        %v883 = vld [vmem:[#allocation2 + $0x18] sm:$0xf]
        %v884 = vld [vmem:[#allocation2 + $0x1c] sm:$0xf]
        %v885 = vld [vmem:[#allocation2 + $0x20] sm:$0xf]
        %v886 = vld [vmem:[#allocation2 + $0x24] sm:$0xf]
        %v887 = vld [vmem:[#allocation2 + $0x28] sm:$0xf]
        %v888 = vld [vmem:[#allocation2 + $0x2c] sm:$0xf]
        %v889 = vld [vmem:[#allocation2 + $0x30] sm:$0xf]
        %v890 = vld [vmem:[#allocation2 + $0x34] sm:$0xf]
        %v891 = vld [vmem:[#allocation2 + $0x38] sm:$0xf]
        %v892 = vld [vmem:[#allocation2 + $0x3c] sm:$0xf]
        %v893 = vld [vmem:[#allocation2 + $0x40] sm:$0xf]
        %v894 = vld [vmem:[#allocation2 + $0x44] sm:$0xf]
        %v895 = vld [vmem:[#allocation2 + $0x48] sm:$0xf]
        %v896 = vld [vmem:[#allocation2 + $0x4c] sm:$0xf]
        %v897 = vld [vmem:[#allocation2 + $0x50] sm:$0xf]
        %v898 = vld [vmem:[#allocation2 + $0x54] sm:$0xf]
        %v899 = vld [vmem:[#allocation2 + $0x58] sm:$0xf]
        %v900 = vld [vmem:[#allocation2 + $0x5c] sm:$0xf]
        %v901 = vld [vmem:[#allocation2 + $0x60] sm:$0xf]
        %v902 = vld [vmem:[#allocation2 + $0x64] sm:$0xf]
        %v903 = vld [vmem:[#allocation2 + $0x68] sm:$0xf]
        %v904 = vld [vmem:[#allocation2 + $0x6c] sm:$0xf]
        %v905 = vld [vmem:[#allocation2 + $0x70] sm:$0xf]
        %v906 = vld [vmem:[#allocation2 + $0x74] sm:$0xf]
        %v907 = vld [vmem:[#allocation2 + $0x78] sm:$0xf]
        %v908 = vld [vmem:[#allocation2 + $0x7c] sm:$0xf]
        %v909 = vld [vmem:[#allocation2 + $0x80] sm:$0xf]
        %v910 = vld [vmem:[#allocation2 + $0x84] sm:$0xf]
        %v911 = vld [vmem:[#allocation2 + $0x88] sm:$0xf]
        %v912 = vld [vmem:[#allocation2 + $0x8c] sm:$0xf]
        %v913 = vld [vmem:[#allocation2 + $0x90] sm:$0xf]
        %v914 = vld [vmem:[#allocation2 + $0x94] sm:$0xf]
        %v915 = vld [vmem:[#allocation2 + $0x98] sm:$0xf]
        %v916 = vld [vmem:[#allocation2 + $0x9c] sm:$0xf]
        %v917 = vld [vmem:[#allocation2 + $0xa0] sm:$0xf]
        %v918 = vld [vmem:[#allocation2 + $0xa4] sm:$0xf]
        %v919 = vld [vmem:[#allocation2 + $0xa8] sm:$0xf]
        %v920 = vld [vmem:[#allocation2 + $0xac] sm:$0xf]
        %v921 = vld [vmem:[#allocation2 + $0xb0] sm:$0xf]
        %v922 = vld [vmem:[#allocation2 + $0xb4] sm:$0xf]
        %v923 = vld [vmem:[#allocation2 + $0xb8] sm:$0xf]
        %v924 = vld [vmem:[#allocation2 + $0xbc] sm:$0xf]
        %s925 = scalar_lea.vmem [#allocation2], 192
        %v926 = vld [vmem:[%s925] sm:$0xf]
        %v927 = vld [vmem:[%s925 + $0x4] sm:$0xf]
        %v928 = vld [vmem:[%s925 + $0x8] sm:$0xf]
        %v929 = vld [vmem:[%s925 + $0xc] sm:$0xf]
        %v930 = vld [vmem:[%s925 + $0x10] sm:$0xf]
        %v931 = vld [vmem:[%s925 + $0x14] sm:$0xf]
        %v932 = vld [vmem:[%s925 + $0x18] sm:$0xf]
        %v933 = vld [vmem:[%s925 + $0x1c] sm:$0xf]
        %v934 = vld [vmem:[%s925 + $0x20] sm:$0xf]
        %v935 = vld [vmem:[%s925 + $0x24] sm:$0xf]
        %v936 = vld [vmem:[%s925 + $0x28] sm:$0xf]
        %v937 = vld [vmem:[%s925 + $0x2c] sm:$0xf]
        %v938 = vld [vmem:[%s925 + $0x30] sm:$0xf]
        %v939 = vld [vmem:[%s925 + $0x34] sm:$0xf]
        %v940 = vld [vmem:[%s925 + $0x38] sm:$0xf]
        %v941 = vld [vmem:[%s925 + $0x3c] sm:$0xf]
        %v942 = vld [vmem:[%s925 + $0x40] sm:$0xf]
        %v943 = vld [vmem:[%s925 + $0x44] sm:$0xf]
        %v944 = vld [vmem:[%s925 + $0x48] sm:$0xf]
        %v945 = vld [vmem:[%s925 + $0x4c] sm:$0xf]
        %v946 = vld [vmem:[%s925 + $0x50] sm:$0xf]
        %v947 = vld [vmem:[%s925 + $0x54] sm:$0xf]
        %v948 = vld [vmem:[%s925 + $0x58] sm:$0xf]
        %v949 = vld [vmem:[%s925 + $0x5c] sm:$0xf]
        %v950 = vld [vmem:[%s925 + $0x60] sm:$0xf]
        %v951 = vld [vmem:[%s925 + $0x64] sm:$0xf]
        %v952 = vld [vmem:[%s925 + $0x68] sm:$0xf]
        %v953 = vld [vmem:[%s925 + $0x6c] sm:$0xf]
        %v954 = vld [vmem:[%s925 + $0x70] sm:$0xf]
        %v955 = vld [vmem:[%s925 + $0x74] sm:$0xf]
        %v956 = vld [vmem:[%s925 + $0x78] sm:$0xf]
        %v957 = vld [vmem:[%s925 + $0x7c] sm:$0xf]
        %v958 = vld [vmem:[%s925 + $0x80] sm:$0xf]
        %v959 = vld [vmem:[%s925 + $0x84] sm:$0xf]
        %v960 = vld [vmem:[%s925 + $0x88] sm:$0xf]
        %v961 = vld [vmem:[%s925 + $0x8c] sm:$0xf]
        %v962 = vld [vmem:[%s925 + $0x90] sm:$0xf]
        %v963 = vld [vmem:[%s925 + $0x94] sm:$0xf]
        %v964 = vld [vmem:[%s925 + $0x98] sm:$0xf]
        %v965 = vld [vmem:[%s925 + $0x9c] sm:$0xf]
        %v966 = vld [vmem:[%s925 + $0xa0] sm:$0xf]
        %v967 = vld [vmem:[%s925 + $0xa4] sm:$0xf]
        %v968 = vld [vmem:[%s925 + $0xa8] sm:$0xf]
        %v969 = vld [vmem:[%s925 + $0xac] sm:$0xf]
        %v970 = vld [vmem:[%s925 + $0xb0] sm:$0xf]
        %v971 = vld [vmem:[%s925 + $0xb4] sm:$0xf]
        %v972 = vld [vmem:[%s925 + $0xb8] sm:$0xf]
        %v973 = vld [vmem:[%s925 + $0xbc] sm:$0xf]
        %v1022 = vunpack.c.l.b16 %v926
        %v1023 = vunpack.c.l.b16 %v927
        %v1024 = vunpack.c.l.b16 %v928
        %v1025 = vunpack.c.l.b16 %v929
        %v1026 = vunpack.c.l.b16 %v930
        %v1027 = vunpack.c.l.b16 %v931
        %v1028 = vunpack.c.l.b16 %v932
        %v1029 = vunpack.c.l.b16 %v933
        %v1030 = vunpack.c.l.b16 %v934
        %v1031 = vunpack.c.l.b16 %v935
        %v1032 = vunpack.c.l.b16 %v936
        %v1033 = vunpack.c.l.b16 %v937
        %v1034 = vunpack.c.l.b16 %v938
        %v1035 = vunpack.c.l.b16 %v939
        %v1036 = vunpack.c.l.b16 %v940
        %v1037 = vunpack.c.l.b16 %v941
        %v1038 = vunpack.c.l.b16 %v942
        %v1039 = vunpack.c.l.b16 %v943
        %v1040 = vunpack.c.l.b16 %v944
        %v1041 = vunpack.c.l.b16 %v945
        %v1042 = vunpack.c.l.b16 %v946
        %v1043 = vunpack.c.l.b16 %v947
        %v1044 = vunpack.c.l.b16 %v948
        %v1045 = vunpack.c.l.b16 %v949
        %v1046 = vunpack.c.l.b16 %v950
        %v1047 = vunpack.c.l.b16 %v951
        %v1048 = vunpack.c.l.b16 %v952
        %v1049 = vunpack.c.l.b16 %v953
        %v1050 = vunpack.c.l.b16 %v954
        %v1051 = vunpack.c.l.b16 %v955
        %v1052 = vunpack.c.l.b16 %v956
        %v1053 = vunpack.c.l.b16 %v957
        %v1054 = vunpack.c.l.b16 %v958
        %v1055 = vunpack.c.l.b16 %v959
        %v1056 = vunpack.c.l.b16 %v960
        %v1057 = vunpack.c.l.b16 %v961
        %v1058 = vunpack.c.l.b16 %v962
        %v1059 = vunpack.c.l.b16 %v963
        %v1060 = vunpack.c.l.b16 %v964
        %v1061 = vunpack.c.l.b16 %v965
        %v1062 = vunpack.c.l.b16 %v966
        %v1063 = vunpack.c.l.b16 %v967
        %v1064 = vunpack.c.l.b16 %v968
        %v1065 = vunpack.c.l.b16 %v969
        %v1066 = vunpack.c.l.b16 %v970
        %v1067 = vunpack.c.l.b16 %v971
        %v1068 = vunpack.c.l.b16 %v972
        %v1069 = vunpack.c.l.b16 %v973
        %v1070 = vpack.c.b16 %v1023, %v1022
        %v1071 = vpack.c.b16 %v1025, %v1024
        %v1072 = vpack.c.b16 %v1027, %v1026
        %v1073 = vpack.c.b16 %v1029, %v1028
        %v1074 = vpack.c.b16 %v1031, %v1030
        %v1075 = vpack.c.b16 %v1033, %v1032
        %v1076 = vpack.c.b16 %v1035, %v1034
        %v1077 = vpack.c.b16 %v1037, %v1036
        %v1078 = vpack.c.b16 %v1039, %v1038
        %v1079 = vpack.c.b16 %v1041, %v1040
        %v1080 = vpack.c.b16 %v1043, %v1042
        %v1081 = vpack.c.b16 %v1045, %v1044
        %v1082 = vpack.c.b16 %v1047, %v1046
        %v1083 = vpack.c.b16 %v1049, %v1048
        %v1084 = vpack.c.b16 %v1051, %v1050
        %v1085 = vpack.c.b16 %v1053, %v1052
        %v1086 = vpack.c.b16 %v1055, %v1054
        %v1087 = vpack.c.b16 %v1057, %v1056
        %v1088 = vpack.c.b16 %v1059, %v1058
        %v1089 = vpack.c.b16 %v1061, %v1060
        %v1090 = vpack.c.b16 %v1063, %v1062
        %v1091 = vpack.c.b16 %v1065, %v1064
        %v1092 = vpack.c.b16 %v1067, %v1066
        %v1093 = vpack.c.b16 %v1069, %v1068
        %1118 = vmatprep.subr.bf16.mxu0 0
        %1119 = vmatpush1.bf16.msra.mxu0 %v1070
        %1120 = vmatprep.subr.bf16.mxu0 0
        %1121 = vmatpush1.bf16.msra.mxu0 %v1071
        %1122 = vmatprep.subr.bf16.mxu0 0
        %1123 = vmatpush1.bf16.msra.mxu0 %v1072
        %1124 = vmatprep.subr.bf16.mxu0 0
        %1125 = vmatpush1.bf16.msra.mxu0 %v1073
        %1126 = vmatprep.subr.bf16.mxu0 0
        %1127 = vmatpush1.bf16.msra.mxu0 %v1074
        %1128 = vmatprep.subr.bf16.mxu0 0
        %1129 = vmatpush1.bf16.msra.mxu0 %v1075
        %1130 = vmatprep.subr.bf16.mxu0 0
        %1131 = vmatpush1.bf16.msra.mxu0 %v1076
        %1132 = vmatprep.subr.bf16.mxu0 0
        %1133 = vmatpush1.bf16.msra.mxu0 %v1077
        %1134 = vmatprep.subr.bf16.mxu0 0
        %1135 = vmatpush1.bf16.msra.mxu0 %v1078
        %1136 = vmatprep.subr.bf16.mxu0 0
        %1137 = vmatpush1.bf16.msra.mxu0 %v1079
        %1138 = vmatprep.subr.bf16.mxu0 0
        %1139 = vmatpush1.bf16.msra.mxu0 %v1080
        %1140 = vmatprep.subr.bf16.mxu0 0
        %1141 = vmatpush1.bf16.msra.mxu0 %v1081
        %1142 = vmatprep.subr.bf16.mxu0 0
        %1143 = vmatpush1.bf16.msra.mxu0 %v1082
        %1144 = vmatprep.subr.bf16.mxu0 0
        %1145 = vmatpush1.bf16.msra.mxu0 %v1083
        %1146 = vmatprep.subr.bf16.mxu0 0
        %1147 = vmatpush1.bf16.msra.mxu0 %v1084
        %1148 = vmatprep.subr.bf16.mxu0 0
        %1149 = vmatpush1.bf16.msra.mxu0 %v1085
        %1150 = vmatprep.mubr.bf16.mxu0 %v854
        %1151 = vmatmul.mubr.bf16.gmra.mrb[0].mxu0 %v853
        %v1152 = vpop.f32.mrb[0].mxu0
        %v1153 = vadd.f32 0.0, %v1152
        %v1154 = vpop.f32.mrb[0].mxu0
        %v1155 = vpop.f32.mrb[0].mxu0
        %v1156 = vadd.f32 0.0, %v1155
        %v1157 = vpop.f32.mrb[0].mxu0
        %1158 = vmatprep.mubr.bf16.mxu0 %v857
        %1159 = vmatmul.mubr.bf16.gmra.mrb[0].mxu0 %v856
        %v1160 = vpop.f32.mrb[0].mxu0
        %v1161 = vadd.f32 0.0, %v1160
        %v1162 = vpop.f32.mrb[0].mxu0
        %v1163 = vpop.f32.mrb[0].mxu0
        %v1164 = vadd.f32 0.0, %v1163
        %v1165 = vpop.f32.mrb[0].mxu0
        %1166 = vmatprep.mubr.bf16.mxu0 %v860
        %1167 = vmatmul.mubr.bf16.gmra.mrb[0].mxu0 %v859
        %v1168 = vpop.f32.mrb[0].mxu0
        %v1169 = vadd.f32 0.0, %v1168
        %v1170 = vpop.f32.mrb[0].mxu0
        %v1171 = vpop.f32.mrb[0].mxu0
        %v1172 = vadd.f32 0.0, %v1171
        %v1173 = vpop.f32.mrb[0].mxu0
        %1174 = vmatprep.mubr.bf16.mxu0 %v863
        %1175 = vmatmul.mubr.bf16.gmra.mrb[0].mxu0 %v862
        %v1176 = vpop.f32.mrb[0].mxu0
        %v1177 = vadd.f32 0.0, %v1176
        %v1178 = vpop.f32.mrb[0].mxu0
        %v1179 = vpop.f32.mrb[0].mxu0
        %v1180 = vadd.f32 0.0, %v1179
        %v1181 = vpop.f32.mrb[0].mxu0
        %1182 = vmatprep.mubr.bf16.mxu0 %v866
        %1183 = vmatmul.mubr.bf16.gmra.mrb[0].mxu0 %v865
        %v1184 = vpop.f32.mrb[0].mxu0
        %v1185 = vadd.f32 0.0, %v1184
        %v1186 = vpop.f32.mrb[0].mxu0
        %v1187 = vpop.f32.mrb[0].mxu0
        %v1188 = vadd.f32 0.0, %v1187
        %v1189 = vpop.f32.mrb[0].mxu0
        %1190 = vmatprep.mubr.bf16.mxu0 %v869
        %1191 = vmatmul.mubr.bf16.gmra.mrb[0].mxu0 %v868
        %v1192 = vpop.f32.mrb[0].mxu0
        %v1193 = vadd.f32 0.0, %v1192
        %v1194 = vpop.f32.mrb[0].mxu0
        %v1195 = vpop.f32.mrb[0].mxu0
        %v1196 = vadd.f32 0.0, %v1195
        %v1197 = vpop.f32.mrb[0].mxu0
        %1198 = vmatprep.mubr.bf16.mxu0 %v872
        %1199 = vmatmul.mubr.bf16.gmra.mrb[0].mxu0 %v871
        %v1200 = vpop.f32.mrb[0].mxu0
        %v1201 = vadd.f32 0.0, %v1200
        %v1202 = vpop.f32.mrb[0].mxu0
        %v1203 = vpop.f32.mrb[0].mxu0
        %v1204 = vadd.f32 0.0, %v1203
        %v1205 = vpop.f32.mrb[0].mxu0
        %1206 = vmatprep.mubr.bf16.mxu0 %v875
        %1207 = vmatmul.mubr.bf16.gmra.mrb[0].mxu0 %v874
        %v1208 = vpop.f32.mrb[0].mxu0
        %v1209 = vadd.f32 0.0, %v1208
        %v1210 = vpop.f32.mrb[0].mxu0
        %v1211 = vpop.f32.mrb[0].mxu0
        %v1212 = vadd.f32 0.0, %v1211
        %v1213 = vpop.f32.mrb[0].mxu0
        %1214 = vdwg.mxu0
        %1215 = vmatprep.subr.bf16.mxu0 0
        %1216 = vmatpush1.bf16.msra.mxu0 %v1086
        %1217 = vmatprep.subr.bf16.mxu0 0
        %1218 = vmatpush1.bf16.msra.mxu0 %v1087
        %1219 = vmatprep.subr.bf16.mxu0 0
        %1220 = vmatpush1.bf16.msra.mxu0 %v1088
        %1221 = vmatprep.subr.bf16.mxu0 0
        %1222 = vmatpush1.bf16.msra.mxu0 %v1089
        %1223 = vmatprep.subr.bf16.mxu0 0
        %1224 = vmatpush1.bf16.msra.mxu0 %v1090
        %1225 = vmatprep.subr.bf16.mxu0 0
        %1226 = vmatpush1.bf16.msra.mxu0 %v1091
        %1227 = vmatprep.subr.bf16.mxu0 0
        %1228 = vmatpush1.bf16.msra.mxu0 %v1092
        %1229 = vmatprep.subr.bf16.mxu0 0
        %1230 = vmatpush1.bf16.msra.mxu0 %v1093
        %1231 = vmatprep.subr.bf16.mxu0 0
        %1232 = vmatpush1.bf16.msra.mxu0 0
        %1233 = vmatprep.subr.bf16.mxu0 0
        %1234 = vmatpush1.bf16.msra.mxu0 0
        %1235 = vmatprep.subr.bf16.mxu0 0
        %1236 = vmatpush1.bf16.msra.mxu0 0
        %1237 = vmatprep.subr.bf16.mxu0 0
        %1238 = vmatpush1.bf16.msra.mxu0 0
        %1239 = vmatprep.subr.bf16.mxu0 0
        %1240 = vmatpush1.bf16.msra.mxu0 0
        %1241 = vmatprep.subr.bf16.mxu0 0
        %1242 = vmatpush1.bf16.msra.mxu0 0
        %1243 = vmatprep.subr.bf16.mxu0 0
        %1244 = vmatpush1.bf16.msra.mxu0 0
        %1245 = vmatprep.subr.bf16.mxu0 0
        %1246 = vmatpush1.bf16.msra.mxu0 0
        %1247 = vmatprep.mubr.bf16.mxu0 0
        %1248 = vmatmul.mubr.bf16.gmra.mrb[0].mxu0 %v855
        %v1249 = vpop.f32.mrb[0].mxu0
        %v1250 = vadd.f32 %v1153, %v1249
        %v1251 = vpop.f32.mrb[0].mxu0
        %v1252 = vpop.f32.mrb[0].mxu0
        %v1253 = vadd.f32 %v1156, %v1252
        %v1254 = vpop.f32.mrb[0].mxu0
        %1255 = vmatprep.mubr.bf16.mxu0 0
        %1256 = vmatmul.mubr.bf16.gmra.mrb[0].mxu0 %v858
        %v1257 = vpop.f32.mrb[0].mxu0
        %v1258 = vadd.f32 %v1161, %v1257
        %v1259 = vpop.f32.mrb[0].mxu0
        %v1260 = vpop.f32.mrb[0].mxu0
        %v1261 = vadd.f32 %v1164, %v1260
        %v1262 = vpop.f32.mrb[0].mxu0
        %1263 = vmatprep.mubr.bf16.mxu0 0
        %1264 = vmatmul.mubr.bf16.gmra.mrb[0].mxu0 %v861
        %v1265 = vpop.f32.mrb[0].mxu0
        %v1266 = vadd.f32 %v1169, %v1265
        %v1267 = vpop.f32.mrb[0].mxu0
        %v1268 = vpop.f32.mrb[0].mxu0
        %v1269 = vadd.f32 %v1172, %v1268
        %v1270 = vpop.f32.mrb[0].mxu0
        %1271 = vmatprep.mubr.bf16.mxu0 0
        %1272 = vmatmul.mubr.bf16.gmra.mrb[0].mxu0 %v864
        %v1273 = vpop.f32.mrb[0].mxu0
        %v1274 = vadd.f32 %v1177, %v1273
        %v1275 = vpop.f32.mrb[0].mxu0
        %v1276 = vpop.f32.mrb[0].mxu0
        %v1277 = vadd.f32 %v1180, %v1276
        %v1278 = vpop.f32.mrb[0].mxu0
        %1279 = vmatprep.mubr.bf16.mxu0 0
        %1280 = vmatmul.mubr.bf16.gmra.mrb[0].mxu0 %v867
        %v1281 = vpop.f32.mrb[0].mxu0
        %v1282 = vadd.f32 %v1185, %v1281
        %v1283 = vpop.f32.mrb[0].mxu0
        %v1284 = vpop.f32.mrb[0].mxu0
        %v1285 = vadd.f32 %v1188, %v1284
        %v1286 = vpop.f32.mrb[0].mxu0
        %1287 = vmatprep.mubr.bf16.mxu0 0
        %1288 = vmatmul.mubr.bf16.gmra.mrb[0].mxu0 %v870
        %v1289 = vpop.f32.mrb[0].mxu0
        %v1290 = vadd.f32 %v1193, %v1289
        %v1291 = vpop.f32.mrb[0].mxu0
        %v1292 = vpop.f32.mrb[0].mxu0
        %v1293 = vadd.f32 %v1196, %v1292
        %v1294 = vpop.f32.mrb[0].mxu0
        %1295 = vmatprep.mubr.bf16.mxu0 0
        %1296 = vmatmul.mubr.bf16.gmra.mrb[0].mxu0 %v873
        %v1297 = vpop.f32.mrb[0].mxu0
        %v1298 = vadd.f32 %v1201, %v1297
        %v1299 = vpop.f32.mrb[0].mxu0
        %v1300 = vpop.f32.mrb[0].mxu0
        %v1301 = vadd.f32 %v1204, %v1300
        %v1302 = vpop.f32.mrb[0].mxu0
        %1303 = vmatprep.mubr.bf16.mxu0 0
        %1304 = vmatmul.mubr.bf16.gmra.mrb[0].mxu0 %v876
        %v1305 = vpop.f32.mrb[0].mxu0
        %v1306 = vadd.f32 %v1209, %v1305
        %v1307 = vpop.f32.mrb[0].mxu0
        %v1308 = vpop.f32.mrb[0].mxu0
        %v1309 = vadd.f32 %v1212, %v1308
        %v1310 = vpop.f32.mrb[0].mxu0
        %1311 = vdwg.mxu0
        %v1360 = vunpack.c.l.b16 %v877
        %v1361 = vunpack.c.l.b16 %v878
        %v1362 = vunpack.c.l.b16 %v879
        %v1363 = vunpack.c.l.b16 %v880
        %v1364 = vunpack.c.l.b16 %v881
        %v1365 = vunpack.c.l.b16 %v882
        %v1366 = vunpack.c.l.b16 %v883
        %v1367 = vunpack.c.l.b16 %v884
        %v1368 = vunpack.c.l.b16 %v885
        %v1369 = vunpack.c.l.b16 %v886
        %v1370 = vunpack.c.l.b16 %v887
        %v1371 = vunpack.c.l.b16 %v888
        %v1372 = vunpack.c.l.b16 %v889
        %v1373 = vunpack.c.l.b16 %v890
        %v1374 = vunpack.c.l.b16 %v891
        %v1375 = vunpack.c.l.b16 %v892
        %v1376 = vunpack.c.l.b16 %v893
        %v1377 = vunpack.c.l.b16 %v894
        %v1378 = vunpack.c.l.b16 %v895
        %v1379 = vunpack.c.l.b16 %v896
        %v1380 = vunpack.c.l.b16 %v897
        %v1381 = vunpack.c.l.b16 %v898
        %v1382 = vunpack.c.l.b16 %v899
        %v1383 = vunpack.c.l.b16 %v900
        %v1384 = vunpack.c.l.b16 %v901
        %v1385 = vunpack.c.l.b16 %v902
        %v1386 = vunpack.c.l.b16 %v903
        %v1387 = vunpack.c.l.b16 %v904
        %v1388 = vunpack.c.l.b16 %v905
        %v1389 = vunpack.c.l.b16 %v906
        %v1390 = vunpack.c.l.b16 %v907
        %v1391 = vunpack.c.l.b16 %v908
        %v1392 = vunpack.c.l.b16 %v909
        %v1393 = vunpack.c.l.b16 %v910
        %v1394 = vunpack.c.l.b16 %v911
        %v1395 = vunpack.c.l.b16 %v912
        %v1396 = vunpack.c.l.b16 %v913
        %v1397 = vunpack.c.l.b16 %v914
        %v1398 = vunpack.c.l.b16 %v915
        %v1399 = vunpack.c.l.b16 %v916
        %v1400 = vunpack.c.l.b16 %v917
        %v1401 = vunpack.c.l.b16 %v918
        %v1402 = vunpack.c.l.b16 %v919
        %v1403 = vunpack.c.l.b16 %v920
        %v1404 = vunpack.c.l.b16 %v921
        %v1405 = vunpack.c.l.b16 %v922
        %v1406 = vunpack.c.l.b16 %v923
        %v1407 = vunpack.c.l.b16 %v924
        %v1408 = vpack.c.b16 %v1361, %v1360
        %v1409 = vpack.c.b16 %v1363, %v1362
        %v1410 = vpack.c.b16 %v1365, %v1364
        %v1411 = vpack.c.b16 %v1367, %v1366
        %v1412 = vpack.c.b16 %v1369, %v1368
        %v1413 = vpack.c.b16 %v1371, %v1370
        %v1414 = vpack.c.b16 %v1373, %v1372
        %v1415 = vpack.c.b16 %v1375, %v1374
        %v1416 = vpack.c.b16 %v1377, %v1376
        %v1417 = vpack.c.b16 %v1379, %v1378
        %v1418 = vpack.c.b16 %v1381, %v1380
        %v1419 = vpack.c.b16 %v1383, %v1382
        %v1420 = vpack.c.b16 %v1385, %v1384
        %v1421 = vpack.c.b16 %v1387, %v1386
        %v1422 = vpack.c.b16 %v1389, %v1388
        %v1423 = vpack.c.b16 %v1391, %v1390
        %v1424 = vpack.c.b16 %v1393, %v1392
        %v1425 = vpack.c.b16 %v1395, %v1394
        %v1426 = vpack.c.b16 %v1397, %v1396
        %v1427 = vpack.c.b16 %v1399, %v1398
        %v1428 = vpack.c.b16 %v1401, %v1400
        %v1429 = vpack.c.b16 %v1403, %v1402
        %v1430 = vpack.c.b16 %v1405, %v1404
        %v1431 = vpack.c.b16 %v1407, %v1406
        %1456 = vmatprep.subr.bf16.mxu0 0
        %1457 = vmatpush1.bf16.msra.mxu0 %v1408
        %1458 = vmatprep.subr.bf16.mxu0 0
        %1459 = vmatpush1.bf16.msra.mxu0 %v1409
        %1460 = vmatprep.subr.bf16.mxu0 0
        %1461 = vmatpush1.bf16.msra.mxu0 %v1410
        %1462 = vmatprep.subr.bf16.mxu0 0
        %1463 = vmatpush1.bf16.msra.mxu0 %v1411
        %1464 = vmatprep.subr.bf16.mxu0 0
        %1465 = vmatpush1.bf16.msra.mxu0 %v1412
        %1466 = vmatprep.subr.bf16.mxu0 0
        %1467 = vmatpush1.bf16.msra.mxu0 %v1413
        %1468 = vmatprep.subr.bf16.mxu0 0
        %1469 = vmatpush1.bf16.msra.mxu0 %v1414
        %1470 = vmatprep.subr.bf16.mxu0 0
        %1471 = vmatpush1.bf16.msra.mxu0 %v1415
        %1472 = vmatprep.subr.bf16.mxu0 0
        %1473 = vmatpush1.bf16.msra.mxu0 %v1416
        %1474 = vmatprep.subr.bf16.mxu0 0
        %1475 = vmatpush1.bf16.msra.mxu0 %v1417
        %1476 = vmatprep.subr.bf16.mxu0 0
        %1477 = vmatpush1.bf16.msra.mxu0 %v1418
        %1478 = vmatprep.subr.bf16.mxu0 0
        %1479 = vmatpush1.bf16.msra.mxu0 %v1419
        %1480 = vmatprep.subr.bf16.mxu0 0
        %1481 = vmatpush1.bf16.msra.mxu0 %v1420
        %1482 = vmatprep.subr.bf16.mxu0 0
        %1483 = vmatpush1.bf16.msra.mxu0 %v1421
        %1484 = vmatprep.subr.bf16.mxu0 0
        %1485 = vmatpush1.bf16.msra.mxu0 %v1422
        %1486 = vmatprep.subr.bf16.mxu0 0
        %1487 = vmatpush1.bf16.msra.mxu0 %v1423
        %1488 = vmatprep.mubr.bf16.mxu0 %v854
        %1489 = vmatmul.mubr.bf16.gmra.mrb[0].mxu0 %v853
        %v1490 = vpop.f32.mrb[0].mxu0
        %v1491 = vadd.f32 %v1250, %v1490
        %v1492 = vpop.f32.mrb[0].mxu0
        %v1493 = vpop.f32.mrb[0].mxu0
        %v1494 = vadd.f32 %v1253, %v1493
        %v1495 = vpop.f32.mrb[0].mxu0
        %1496 = vmatprep.mubr.bf16.mxu0 %v857
        %1497 = vmatmul.mubr.bf16.gmra.mrb[0].mxu0 %v856
        %v1498 = vpop.f32.mrb[0].mxu0
        %v1499 = vadd.f32 %v1258, %v1498
        %v1500 = vpop.f32.mrb[0].mxu0
        %v1501 = vpop.f32.mrb[0].mxu0
        %v1502 = vadd.f32 %v1261, %v1501
        %v1503 = vpop.f32.mrb[0].mxu0
        %1504 = vmatprep.mubr.bf16.mxu0 %v860
        %1505 = vmatmul.mubr.bf16.gmra.mrb[0].mxu0 %v859
        %v1506 = vpop.f32.mrb[0].mxu0
        %v1507 = vadd.f32 %v1266, %v1506
        %v1508 = vpop.f32.mrb[0].mxu0
        %v1509 = vpop.f32.mrb[0].mxu0
        %v1510 = vadd.f32 %v1269, %v1509
        %v1511 = vpop.f32.mrb[0].mxu0
        %1512 = vmatprep.mubr.bf16.mxu0 %v863
        %1513 = vmatmul.mubr.bf16.gmra.mrb[0].mxu0 %v862
        %v1514 = vpop.f32.mrb[0].mxu0
        %v1515 = vadd.f32 %v1274, %v1514
        %v1516 = vpop.f32.mrb[0].mxu0
        %v1517 = vpop.f32.mrb[0].mxu0
        %v1518 = vadd.f32 %v1277, %v1517
        %v1519 = vpop.f32.mrb[0].mxu0
        %1520 = vmatprep.mubr.bf16.mxu0 %v866
        %1521 = vmatmul.mubr.bf16.gmra.mrb[0].mxu0 %v865
        %v1522 = vpop.f32.mrb[0].mxu0
        %v1523 = vadd.f32 %v1282, %v1522
        %v1524 = vpop.f32.mrb[0].mxu0
        %v1525 = vpop.f32.mrb[0].mxu0
        %v1526 = vadd.f32 %v1285, %v1525
        %v1527 = vpop.f32.mrb[0].mxu0
        %1528 = vmatprep.mubr.bf16.mxu0 %v869
        %1529 = vmatmul.mubr.bf16.gmra.mrb[0].mxu0 %v868
        %v1530 = vpop.f32.mrb[0].mxu0
        %v1531 = vadd.f32 %v1290, %v1530
        %v1532 = vpop.f32.mrb[0].mxu0
        %v1533 = vpop.f32.mrb[0].mxu0
        %v1534 = vadd.f32 %v1293, %v1533
        %v1535 = vpop.f32.mrb[0].mxu0
        %1536 = vmatprep.mubr.bf16.mxu0 %v872
        %1537 = vmatmul.mubr.bf16.gmra.mrb[0].mxu0 %v871
        %v1538 = vpop.f32.mrb[0].mxu0
        %v1539 = vadd.f32 %v1298, %v1538
        %v1540 = vpop.f32.mrb[0].mxu0
        %v1541 = vpop.f32.mrb[0].mxu0
        %v1542 = vadd.f32 %v1301, %v1541
        %v1543 = vpop.f32.mrb[0].mxu0
        %1544 = vmatprep.mubr.bf16.mxu0 %v875
        %1545 = vmatmul.mubr.bf16.gmra.mrb[0].mxu0 %v874
        %v1546 = vpop.f32.mrb[0].mxu0
        %v1547 = vadd.f32 %v1306, %v1546
        %v1548 = vpop.f32.mrb[0].mxu0
        %v1549 = vpop.f32.mrb[0].mxu0
        %v1550 = vadd.f32 %v1309, %v1549
        %v1551 = vpop.f32.mrb[0].mxu0
        %1552 = vdwg.mxu0
        %1553 = vmatprep.subr.bf16.mxu0 0
        %1554 = vmatpush1.bf16.msra.mxu0 %v1424
        %1555 = vmatprep.subr.bf16.mxu0 0
        %1556 = vmatpush1.bf16.msra.mxu0 %v1425
        %1557 = vmatprep.subr.bf16.mxu0 0
        %1558 = vmatpush1.bf16.msra.mxu0 %v1426
        %1559 = vmatprep.subr.bf16.mxu0 0
        %1560 = vmatpush1.bf16.msra.mxu0 %v1427
        %1561 = vmatprep.subr.bf16.mxu0 0
        %1562 = vmatpush1.bf16.msra.mxu0 %v1428
        %1563 = vmatprep.subr.bf16.mxu0 0
        %1564 = vmatpush1.bf16.msra.mxu0 %v1429
        %1565 = vmatprep.subr.bf16.mxu0 0
        %1566 = vmatpush1.bf16.msra.mxu0 %v1430
        %1567 = vmatprep.subr.bf16.mxu0 0
        %1568 = vmatpush1.bf16.msra.mxu0 %v1431
        %1569 = vmatprep.subr.bf16.mxu0 0
        %1570 = vmatpush1.bf16.msra.mxu0 0
        %1571 = vmatprep.subr.bf16.mxu0 0
        %1572 = vmatpush1.bf16.msra.mxu0 0
        %1573 = vmatprep.subr.bf16.mxu0 0
        %1574 = vmatpush1.bf16.msra.mxu0 0
        %1575 = vmatprep.subr.bf16.mxu0 0
        %1576 = vmatpush1.bf16.msra.mxu0 0
        %1577 = vmatprep.subr.bf16.mxu0 0
        %1578 = vmatpush1.bf16.msra.mxu0 0
        %1579 = vmatprep.subr.bf16.mxu0 0
        %1580 = vmatpush1.bf16.msra.mxu0 0
        %1581 = vmatprep.subr.bf16.mxu0 0
        %1582 = vmatpush1.bf16.msra.mxu0 0
        %1583 = vmatprep.subr.bf16.mxu0 0
        %1584 = vmatpush1.bf16.msra.mxu0 0
        %1585 = vmatprep.mubr.bf16.mxu0 0
        %1586 = vmatmul.mubr.bf16.gmra.mrb[0].mxu0 %v855
        %v1587 = vpop.f32.mrb[0].mxu0
        %v1588 = vadd.f32 %v1491, %v1587
        %v1589 = vpop.f32.mrb[0].mxu0
        %v1590 = vpop.f32.mrb[0].mxu0
        %v1591 = vadd.f32 %v1494, %v1590
        %v1592 = vpop.f32.mrb[0].mxu0
        %1593 = vmatprep.mubr.bf16.mxu0 0
        %1594 = vmatmul.mubr.bf16.gmra.mrb[0].mxu0 %v858
        %v1595 = vpop.f32.mrb[0].mxu0
        %v1596 = vadd.f32 %v1499, %v1595
        %v1597 = vpop.f32.mrb[0].mxu0
        %v1598 = vpop.f32.mrb[0].mxu0
        %v1599 = vadd.f32 %v1502, %v1598
        %v1600 = vpop.f32.mrb[0].mxu0
        %1601 = vmatprep.mubr.bf16.mxu0 0
        %1602 = vmatmul.mubr.bf16.gmra.mrb[0].mxu0 %v861
        %v1603 = vpop.f32.mrb[0].mxu0
        %v1604 = vadd.f32 %v1507, %v1603
        %v1605 = vpop.f32.mrb[0].mxu0
        %v1606 = vpop.f32.mrb[0].mxu0
        %v1607 = vadd.f32 %v1510, %v1606
        %v1608 = vpop.f32.mrb[0].mxu0
        %1609 = vmatprep.mubr.bf16.mxu0 0
        %1610 = vmatmul.mubr.bf16.gmra.mrb[0].mxu0 %v864
        %v1611 = vpop.f32.mrb[0].mxu0
        %v1612 = vadd.f32 %v1515, %v1611
        %v1613 = vpop.f32.mrb[0].mxu0
        %v1614 = vpop.f32.mrb[0].mxu0
        %v1615 = vadd.f32 %v1518, %v1614
        %v1616 = vpop.f32.mrb[0].mxu0
        %1617 = vmatprep.mubr.bf16.mxu0 0
        %1618 = vmatmul.mubr.bf16.gmra.mrb[0].mxu0 %v867
        %v1619 = vpop.f32.mrb[0].mxu0
        %v1620 = vadd.f32 %v1523, %v1619
        %v1621 = vpop.f32.mrb[0].mxu0
        %v1622 = vpop.f32.mrb[0].mxu0
        %v1623 = vadd.f32 %v1526, %v1622
        %v1624 = vpop.f32.mrb[0].mxu0
        %1625 = vmatprep.mubr.bf16.mxu0 0
        %1626 = vmatmul.mubr.bf16.gmra.mrb[0].mxu0 %v870
        %v1627 = vpop.f32.mrb[0].mxu0
        %v1628 = vadd.f32 %v1531, %v1627
        %v1629 = vpop.f32.mrb[0].mxu0
        %v1630 = vpop.f32.mrb[0].mxu0
        %v1631 = vadd.f32 %v1534, %v1630
        %v1632 = vpop.f32.mrb[0].mxu0
        %1633 = vmatprep.mubr.bf16.mxu0 0
        %1634 = vmatmul.mubr.bf16.gmra.mrb[0].mxu0 %v873
        %v1635 = vpop.f32.mrb[0].mxu0
        %v1636 = vadd.f32 %v1539, %v1635
        %v1637 = vpop.f32.mrb[0].mxu0
        %v1638 = vpop.f32.mrb[0].mxu0
        %v1639 = vadd.f32 %v1542, %v1638
        %v1640 = vpop.f32.mrb[0].mxu0
        %1641 = vmatprep.mubr.bf16.mxu0 0
        %1642 = vmatmul.mubr.bf16.gmra.mrb[0].mxu0 %v876
        %v1643 = vpop.f32.mrb[0].mxu0
        %v1644 = vadd.f32 %v1547, %v1643
        %v1645 = vpop.f32.mrb[0].mxu0
        %v1646 = vpop.f32.mrb[0].mxu0
        %v1647 = vadd.f32 %v1550, %v1646
        %v1648 = vpop.f32.mrb[0].mxu0
        %1649 = vdwg.mxu0
        %s1650 = scalar_lea.vmem [#allocation2], 384
        %v1651 = vld [vmem:[%s1650] sm:$0xf]
        %v1652 = vld [vmem:[%s1650 + $0x4] sm:$0xf]
        %v1653 = vld [vmem:[%s1650 + $0x8] sm:$0xf]
        %v1654 = vld [vmem:[%s1650 + $0xc] sm:$0xf]
        %v1655 = vld [vmem:[%s1650 + $0x10] sm:$0xf]
        %v1656 = vld [vmem:[%s1650 + $0x14] sm:$0xf]
        %v1657 = vld [vmem:[%s1650 + $0x18] sm:$0xf]
        %v1658 = vld [vmem:[%s1650 + $0x1c] sm:$0xf]
        %v1659 = vld [vmem:[%s1650 + $0x20] sm:$0xf]
        %v1660 = vld [vmem:[%s1650 + $0x24] sm:$0xf]
        %v1661 = vld [vmem:[%s1650 + $0x28] sm:$0xf]
        %v1662 = vld [vmem:[%s1650 + $0x2c] sm:$0xf]
        %v1663 = vld [vmem:[%s1650 + $0x30] sm:$0xf]
        %v1664 = vld [vmem:[%s1650 + $0x34] sm:$0xf]
        %v1665 = vld [vmem:[%s1650 + $0x38] sm:$0xf]
        %v1666 = vld [vmem:[%s1650 + $0x3c] sm:$0xf]
        %v1667 = vld [vmem:[%s1650 + $0x40] sm:$0xf]
        %v1668 = vld [vmem:[%s1650 + $0x44] sm:$0xf]
        %v1669 = vld [vmem:[%s1650 + $0x48] sm:$0xf]
        %v1670 = vld [vmem:[%s1650 + $0x4c] sm:$0xf]
        %v1671 = vld [vmem:[%s1650 + $0x50] sm:$0xf]
        %v1672 = vld [vmem:[%s1650 + $0x54] sm:$0xf]
        %v1673 = vld [vmem:[%s1650 + $0x58] sm:$0xf]
        %v1674 = vld [vmem:[%s1650 + $0x5c] sm:$0xf]
        %v1675 = vld [vmem:[%s1650 + $0x60] sm:$0xf]
        %v1676 = vld [vmem:[%s1650 + $0x64] sm:$0xf]
        %v1677 = vld [vmem:[%s1650 + $0x68] sm:$0xf]
        %v1678 = vld [vmem:[%s1650 + $0x6c] sm:$0xf]
        %v1679 = vld [vmem:[%s1650 + $0x70] sm:$0xf]
        %v1680 = vld [vmem:[%s1650 + $0x74] sm:$0xf]
        %v1681 = vld [vmem:[%s1650 + $0x78] sm:$0xf]
        %v1682 = vld [vmem:[%s1650 + $0x7c] sm:$0xf]
        %v1683 = vld [vmem:[%s1650 + $0x80] sm:$0xf]
        %v1684 = vld [vmem:[%s1650 + $0x84] sm:$0xf]
        %v1685 = vld [vmem:[%s1650 + $0x88] sm:$0xf]
        %v1686 = vld [vmem:[%s1650 + $0x8c] sm:$0xf]
        %v1687 = vld [vmem:[%s1650 + $0x90] sm:$0xf]
        %v1688 = vld [vmem:[%s1650 + $0x94] sm:$0xf]
        %v1689 = vld [vmem:[%s1650 + $0x98] sm:$0xf]
        %v1690 = vld [vmem:[%s1650 + $0x9c] sm:$0xf]
        %v1691 = vld [vmem:[%s1650 + $0xa0] sm:$0xf]
        %v1692 = vld [vmem:[%s1650 + $0xa4] sm:$0xf]
        %v1693 = vld [vmem:[%s1650 + $0xa8] sm:$0xf]
        %v1694 = vld [vmem:[%s1650 + $0xac] sm:$0xf]
        %v1695 = vld [vmem:[%s1650 + $0xb0] sm:$0xf]
        %v1696 = vld [vmem:[%s1650 + $0xb4] sm:$0xf]
        %v1697 = vld [vmem:[%s1650 + $0xb8] sm:$0xf]
        %v1698 = vld [vmem:[%s1650 + $0xbc] sm:$0xf]
        %v1747 = vunpack.c.l.b16 %v1651
        %v1748 = vunpack.c.l.b16 %v1652
        %v1749 = vunpack.c.l.b16 %v1653
        %v1750 = vunpack.c.l.b16 %v1654
        %v1751 = vunpack.c.l.b16 %v1655
        %v1752 = vunpack.c.l.b16 %v1656
        %v1753 = vunpack.c.l.b16 %v1657
        %v1754 = vunpack.c.l.b16 %v1658
        %v1755 = vunpack.c.l.b16 %v1659
        %v1756 = vunpack.c.l.b16 %v1660
        %v1757 = vunpack.c.l.b16 %v1661
        %v1758 = vunpack.c.l.b16 %v1662
        %v1759 = vunpack.c.l.b16 %v1663
        %v1760 = vunpack.c.l.b16 %v1664
        %v1761 = vunpack.c.l.b16 %v1665
        %v1762 = vunpack.c.l.b16 %v1666
        %v1763 = vunpack.c.l.b16 %v1667
        %v1764 = vunpack.c.l.b16 %v1668
        %v1765 = vunpack.c.l.b16 %v1669
        %v1766 = vunpack.c.l.b16 %v1670
        %v1767 = vunpack.c.l.b16 %v1671
        %v1768 = vunpack.c.l.b16 %v1672
        %v1769 = vunpack.c.l.b16 %v1673
        %v1770 = vunpack.c.l.b16 %v1674
        %v1771 = vunpack.c.l.b16 %v1675
        %v1772 = vunpack.c.l.b16 %v1676
        %v1773 = vunpack.c.l.b16 %v1677
        %v1774 = vunpack.c.l.b16 %v1678
        %v1775 = vunpack.c.l.b16 %v1679
        %v1776 = vunpack.c.l.b16 %v1680
        %v1777 = vunpack.c.l.b16 %v1681
        %v1778 = vunpack.c.l.b16 %v1682
        %v1779 = vunpack.c.l.b16 %v1683
        %v1780 = vunpack.c.l.b16 %v1684
        %v1781 = vunpack.c.l.b16 %v1685
        %v1782 = vunpack.c.l.b16 %v1686
        %v1783 = vunpack.c.l.b16 %v1687
        %v1784 = vunpack.c.l.b16 %v1688
        %v1785 = vunpack.c.l.b16 %v1689
        %v1786 = vunpack.c.l.b16 %v1690
        %v1787 = vunpack.c.l.b16 %v1691
        %v1788 = vunpack.c.l.b16 %v1692
        %v1789 = vunpack.c.l.b16 %v1693
        %v1790 = vunpack.c.l.b16 %v1694
        %v1791 = vunpack.c.l.b16 %v1695
        %v1792 = vunpack.c.l.b16 %v1696
        %v1793 = vunpack.c.l.b16 %v1697
        %v1794 = vunpack.c.l.b16 %v1698
        %v1795 = vpack.c.b16 %v1748, %v1747
        %v1796 = vpack.c.b16 %v1750, %v1749
        %v1797 = vpack.c.b16 %v1752, %v1751
        %v1798 = vpack.c.b16 %v1754, %v1753
        %v1799 = vpack.c.b16 %v1756, %v1755
        %v1800 = vpack.c.b16 %v1758, %v1757
        %v1801 = vpack.c.b16 %v1760, %v1759
        %v1802 = vpack.c.b16 %v1762, %v1761
        %v1803 = vpack.c.b16 %v1764, %v1763
        %v1804 = vpack.c.b16 %v1766, %v1765
        %v1805 = vpack.c.b16 %v1768, %v1767
        %v1806 = vpack.c.b16 %v1770, %v1769
        %v1807 = vpack.c.b16 %v1772, %v1771
        %v1808 = vpack.c.b16 %v1774, %v1773
        %v1809 = vpack.c.b16 %v1776, %v1775
        %v1810 = vpack.c.b16 %v1778, %v1777
        %v1811 = vpack.c.b16 %v1780, %v1779
        %v1812 = vpack.c.b16 %v1782, %v1781
        %v1813 = vpack.c.b16 %v1784, %v1783
        %v1814 = vpack.c.b16 %v1786, %v1785
        %v1815 = vpack.c.b16 %v1788, %v1787
        %v1816 = vpack.c.b16 %v1790, %v1789
        %v1817 = vpack.c.b16 %v1792, %v1791
        %v1818 = vpack.c.b16 %v1794, %v1793
        %1843 = vmatprep.subr.bf16.mxu0 0
        %1844 = vmatpush1.bf16.msra.mxu0 %v1795
        %1845 = vmatprep.subr.bf16.mxu0 0
        %1846 = vmatpush1.bf16.msra.mxu0 %v1796
        %1847 = vmatprep.subr.bf16.mxu0 0
        %1848 = vmatpush1.bf16.msra.mxu0 %v1797
        %1849 = vmatprep.subr.bf16.mxu0 0
        %1850 = vmatpush1.bf16.msra.mxu0 %v1798
        %1851 = vmatprep.subr.bf16.mxu0 0
        %1852 = vmatpush1.bf16.msra.mxu0 %v1799
        %1853 = vmatprep.subr.bf16.mxu0 0
        %1854 = vmatpush1.bf16.msra.mxu0 %v1800
        %1855 = vmatprep.subr.bf16.mxu0 0
        %1856 = vmatpush1.bf16.msra.mxu0 %v1801
        %1857 = vmatprep.subr.bf16.mxu0 0
        %1858 = vmatpush1.bf16.msra.mxu0 %v1802
        %1859 = vmatprep.subr.bf16.mxu0 0
        %1860 = vmatpush1.bf16.msra.mxu0 %v1803
        %1861 = vmatprep.subr.bf16.mxu0 0
        %1862 = vmatpush1.bf16.msra.mxu0 %v1804
        %1863 = vmatprep.subr.bf16.mxu0 0
        %1864 = vmatpush1.bf16.msra.mxu0 %v1805
        %1865 = vmatprep.subr.bf16.mxu0 0
        %1866 = vmatpush1.bf16.msra.mxu0 %v1806
        %1867 = vmatprep.subr.bf16.mxu0 0
        %1868 = vmatpush1.bf16.msra.mxu0 %v1807
        %1869 = vmatprep.subr.bf16.mxu0 0
        %1870 = vmatpush1.bf16.msra.mxu0 %v1808
        %1871 = vmatprep.subr.bf16.mxu0 0
        %1872 = vmatpush1.bf16.msra.mxu0 %v1809
        %1873 = vmatprep.subr.bf16.mxu0 0
        %1874 = vmatpush1.bf16.msra.mxu0 %v1810
        %1875 = vmatprep.mubr.bf16.mxu0 %v854
        %1876 = vmatmul.mubr.bf16.gmra.mrb[0].mxu0 %v853
        %v1877 = vpop.f32.mrb[0].mxu0
        %v1878 = vadd.f32 0.0, %v1877
        %v1879 = vpop.f32.mrb[0].mxu0
        %v1880 = vpop.f32.mrb[0].mxu0
        %v1881 = vadd.f32 0.0, %v1880
        %v1882 = vpop.f32.mrb[0].mxu0
        %1883 = vmatprep.mubr.bf16.mxu0 %v857
        %1884 = vmatmul.mubr.bf16.gmra.mrb[0].mxu0 %v856
        %v1885 = vpop.f32.mrb[0].mxu0
        %v1886 = vadd.f32 0.0, %v1885
        %v1887 = vpop.f32.mrb[0].mxu0
        %v1888 = vpop.f32.mrb[0].mxu0
        %v1889 = vadd.f32 0.0, %v1888
        %v1890 = vpop.f32.mrb[0].mxu0
        %1891 = vmatprep.mubr.bf16.mxu0 %v860
        %1892 = vmatmul.mubr.bf16.gmra.mrb[0].mxu0 %v859
        %v1893 = vpop.f32.mrb[0].mxu0
        %v1894 = vadd.f32 0.0, %v1893
        %v1895 = vpop.f32.mrb[0].mxu0
        %v1896 = vpop.f32.mrb[0].mxu0
        %v1897 = vadd.f32 0.0, %v1896
        %v1898 = vpop.f32.mrb[0].mxu0
        %1899 = vmatprep.mubr.bf16.mxu0 %v863
        %1900 = vmatmul.mubr.bf16.gmra.mrb[0].mxu0 %v862
        %v1901 = vpop.f32.mrb[0].mxu0
        %v1902 = vadd.f32 0.0, %v1901
        %v1903 = vpop.f32.mrb[0].mxu0
        %v1904 = vpop.f32.mrb[0].mxu0
        %v1905 = vadd.f32 0.0, %v1904
        %v1906 = vpop.f32.mrb[0].mxu0
        %1907 = vmatprep.mubr.bf16.mxu0 %v866
        %1908 = vmatmul.mubr.bf16.gmra.mrb[0].mxu0 %v865
        %v1909 = vpop.f32.mrb[0].mxu0
        %v1910 = vadd.f32 0.0, %v1909
        %v1911 = vpop.f32.mrb[0].mxu0
        %v1912 = vpop.f32.mrb[0].mxu0
        %v1913 = vadd.f32 0.0, %v1912
        %v1914 = vpop.f32.mrb[0].mxu0
        %1915 = vmatprep.mubr.bf16.mxu0 %v869
        %1916 = vmatmul.mubr.bf16.gmra.mrb[0].mxu0 %v868
        %v1917 = vpop.f32.mrb[0].mxu0
        %v1918 = vadd.f32 0.0, %v1917
        %v1919 = vpop.f32.mrb[0].mxu0
        %v1920 = vpop.f32.mrb[0].mxu0
        %v1921 = vadd.f32 0.0, %v1920
        %v1922 = vpop.f32.mrb[0].mxu0
        %1923 = vmatprep.mubr.bf16.mxu0 %v872
        %1924 = vmatmul.mubr.bf16.gmra.mrb[0].mxu0 %v871
        %v1925 = vpop.f32.mrb[0].mxu0
        %v1926 = vadd.f32 0.0, %v1925
        %v1927 = vpop.f32.mrb[0].mxu0
        %v1928 = vpop.f32.mrb[0].mxu0
        %v1929 = vadd.f32 0.0, %v1928
        %v1930 = vpop.f32.mrb[0].mxu0
        %1931 = vmatprep.mubr.bf16.mxu0 %v875
        %1932 = vmatmul.mubr.bf16.gmra.mrb[0].mxu0 %v874
        %v1933 = vpop.f32.mrb[0].mxu0
        %v1934 = vadd.f32 0.0, %v1933
        %v1935 = vpop.f32.mrb[0].mxu0
        %v1936 = vpop.f32.mrb[0].mxu0
        %v1937 = vadd.f32 0.0, %v1936
        %v1938 = vpop.f32.mrb[0].mxu0
        %1939 = vdwg.mxu0
        %1940 = vmatprep.subr.bf16.mxu0 0
        %1941 = vmatpush1.bf16.msra.mxu0 %v1811
        %1942 = vmatprep.subr.bf16.mxu0 0
        %1943 = vmatpush1.bf16.msra.mxu0 %v1812
        %1944 = vmatprep.subr.bf16.mxu0 0
        %1945 = vmatpush1.bf16.msra.mxu0 %v1813
        %1946 = vmatprep.subr.bf16.mxu0 0
        %1947 = vmatpush1.bf16.msra.mxu0 %v1814
        %1948 = vmatprep.subr.bf16.mxu0 0
        %1949 = vmatpush1.bf16.msra.mxu0 %v1815
        %1950 = vmatprep.subr.bf16.mxu0 0
        %1951 = vmatpush1.bf16.msra.mxu0 %v1816
        %1952 = vmatprep.subr.bf16.mxu0 0
        %1953 = vmatpush1.bf16.msra.mxu0 %v1817
        %1954 = vmatprep.subr.bf16.mxu0 0
        %1955 = vmatpush1.bf16.msra.mxu0 %v1818
        %1956 = vmatprep.subr.bf16.mxu0 0
        %1957 = vmatpush1.bf16.msra.mxu0 0
        %1958 = vmatprep.subr.bf16.mxu0 0
        %1959 = vmatpush1.bf16.msra.mxu0 0
        %1960 = vmatprep.subr.bf16.mxu0 0
        %1961 = vmatpush1.bf16.msra.mxu0 0
        %1962 = vmatprep.subr.bf16.mxu0 0
        %1963 = vmatpush1.bf16.msra.mxu0 0
        %1964 = vmatprep.subr.bf16.mxu0 0
        %1965 = vmatpush1.bf16.msra.mxu0 0
        %1966 = vmatprep.subr.bf16.mxu0 0
        %1967 = vmatpush1.bf16.msra.mxu0 0
        %1968 = vmatprep.subr.bf16.mxu0 0
        %1969 = vmatpush1.bf16.msra.mxu0 0
        %1970 = vmatprep.subr.bf16.mxu0 0
        %1971 = vmatpush1.bf16.msra.mxu0 0
        %1972 = vmatprep.mubr.bf16.mxu0 0
        %1973 = vmatmul.mubr.bf16.gmra.mrb[0].mxu0 %v855
        %v1974 = vpop.f32.mrb[0].mxu0
        %v1975 = vadd.f32 %v1878, %v1974
        %v1976 = vpop.f32.mrb[0].mxu0
        %v1977 = vpop.f32.mrb[0].mxu0
        %v1978 = vadd.f32 %v1881, %v1977
        %v1979 = vpop.f32.mrb[0].mxu0
        %1980 = vmatprep.mubr.bf16.mxu0 0
        %1981 = vmatmul.mubr.bf16.gmra.mrb[0].mxu0 %v858
        %v1982 = vpop.f32.mrb[0].mxu0
        %v1983 = vadd.f32 %v1886, %v1982
        %v1984 = vpop.f32.mrb[0].mxu0
        %v1985 = vpop.f32.mrb[0].mxu0
        %v1986 = vadd.f32 %v1889, %v1985
        %v1987 = vpop.f32.mrb[0].mxu0
        %1988 = vmatprep.mubr.bf16.mxu0 0
        %1989 = vmatmul.mubr.bf16.gmra.mrb[0].mxu0 %v861
        %v1990 = vpop.f32.mrb[0].mxu0
        %v1991 = vadd.f32 %v1894, %v1990
        %v1992 = vpop.f32.mrb[0].mxu0
        %v1993 = vpop.f32.mrb[0].mxu0
        %v1994 = vadd.f32 %v1897, %v1993
        %v1995 = vpop.f32.mrb[0].mxu0
        %1996 = vmatprep.mubr.bf16.mxu0 0
        %1997 = vmatmul.mubr.bf16.gmra.mrb[0].mxu0 %v864
        %v1998 = vpop.f32.mrb[0].mxu0
        %v1999 = vadd.f32 %v1902, %v1998
        %v2000 = vpop.f32.mrb[0].mxu0
        %v2001 = vpop.f32.mrb[0].mxu0
        %v2002 = vadd.f32 %v1905, %v2001
        %v2003 = vpop.f32.mrb[0].mxu0
        %2004 = vmatprep.mubr.bf16.mxu0 0
        %2005 = vmatmul.mubr.bf16.gmra.mrb[0].mxu0 %v867
        %v2006 = vpop.f32.mrb[0].mxu0
        %v2007 = vadd.f32 %v1910, %v2006
        %v2008 = vpop.f32.mrb[0].mxu0
        %v2009 = vpop.f32.mrb[0].mxu0
        %v2010 = vadd.f32 %v1913, %v2009
        %v2011 = vpop.f32.mrb[0].mxu0
        %2012 = vmatprep.mubr.bf16.mxu0 0
        %2013 = vmatmul.mubr.bf16.gmra.mrb[0].mxu0 %v870
        %v2014 = vpop.f32.mrb[0].mxu0
        %v2015 = vadd.f32 %v1918, %v2014
        %v2016 = vpop.f32.mrb[0].mxu0
        %v2017 = vpop.f32.mrb[0].mxu0
        %v2018 = vadd.f32 %v1921, %v2017
        %v2019 = vpop.f32.mrb[0].mxu0
        %2020 = vmatprep.mubr.bf16.mxu0 0
        %2021 = vmatmul.mubr.bf16.gmra.mrb[0].mxu0 %v873
        %v2022 = vpop.f32.mrb[0].mxu0
        %v2023 = vadd.f32 %v1926, %v2022
        %v2024 = vpop.f32.mrb[0].mxu0
        %v2025 = vpop.f32.mrb[0].mxu0
        %v2026 = vadd.f32 %v1929, %v2025
        %v2027 = vpop.f32.mrb[0].mxu0
        %2028 = vmatprep.mubr.bf16.mxu0 0
        %2029 = vmatmul.mubr.bf16.gmra.mrb[0].mxu0 %v876
        %v2030 = vpop.f32.mrb[0].mxu0
        %v2031 = vadd.f32 %v1934, %v2030
        %v2032 = vpop.f32.mrb[0].mxu0
        %v2033 = vpop.f32.mrb[0].mxu0
        %v2034 = vadd.f32 %v1937, %v2033
        %v2035 = vpop.f32.mrb[0].mxu0
        %2036 = vdwg.mxu0
        %v2037 = vadd.f32 %v1588, %v1975
        %v2038 = vadd.f32 %v1591, %v1978
        %v2039 = vadd.f32 %v1596, %v1983
        %v2040 = vadd.f32 %v1599, %v1986
        %v2041 = vadd.f32 %v1604, %v1991
        %v2042 = vadd.f32 %v1607, %v1994
        %v2043 = vadd.f32 %v1612, %v1999
        %v2044 = vadd.f32 %v1615, %v2002
        %v2045 = vadd.f32 %v1620, %v2007
        %v2046 = vadd.f32 %v1623, %v2010
        %v2047 = vadd.f32 %v1628, %v2015
        %v2048 = vadd.f32 %v1631, %v2018
        %v2049 = vadd.f32 %v1636, %v2023
        %v2050 = vadd.f32 %v1639, %v2026
        %v2051 = vadd.f32 %v1644, %v2031
        %v2052 = vadd.f32 %v1647, %v2034
        %v2053 = vsub.s32 %v161, 256
        %v2054 = vsub.s32 %v162, 256
        %v2055 = vsub.s32 %v163, 256
        %v2056 = vsub.s32 %v164, 256
        %v2057 = vsub.s32 %v165, 256
        %v2058 = vsub.s32 %v166, 256
        %v2059 = vsub.s32 %v167, 256
        %v2060 = vsub.s32 %v168, 256
        %v2061 = vsub.s32 %v169, 256
        %v2062 = vsub.s32 %v170, 256
        %v2063 = vsub.s32 %v171, 256
        %v2064 = vsub.s32 %v172, 256
        %v2065 = vsub.s32 %v173, 256
        %v2066 = vsub.s32 %v174, 256
        %v2067 = vsub.s32 %v175, 256
        %v2068 = vsub.s32 %v176, 256
        %v2069 = vcvt.s32.f32 %v2053
        %v2070 = vcvt.s32.f32 %v2054
        %v2071 = vcvt.s32.f32 %v2055
        %v2072 = vcvt.s32.f32 %v2056
        %v2073 = vcvt.s32.f32 %v2057
        %v2074 = vcvt.s32.f32 %v2058
        %v2075 = vcvt.s32.f32 %v2059
        %v2076 = vcvt.s32.f32 %v2060
        %v2077 = vcvt.s32.f32 %v2061
        %v2078 = vcvt.s32.f32 %v2062
        %v2079 = vcvt.s32.f32 %v2063
        %v2080 = vcvt.s32.f32 %v2064
        %v2081 = vcvt.s32.f32 %v2065
        %v2082 = vcvt.s32.f32 %v2066
        %v2083 = vcvt.s32.f32 %v2067
        %v2084 = vcvt.s32.f32 %v2068
        %vm2085 = vcmp.eq.s32.totalorder %v178, 96
        %v2086 = vsel %vm2085, 1, 0
        %v2087 = vcvt.s32.f32 %v2086
        %2089 = vset.pattern.permute.xlu0 2
        %2090 = vperm.xlu0 %2089, %v2069
        %v2091 = vpop.permute.xlu0 %2090
        %2094 = vset.pattern.permute.xlu0 2
        %2095 = vperm.xlu0 %2094, %v2070
        %v2096 = vpop.permute.xlu0 %2095
        %2099 = vset.pattern.permute.xlu0 2
        %2100 = vperm.xlu0 %2099, %v2071
        %v2101 = vpop.permute.xlu0 %2100
        %2104 = vset.pattern.permute.xlu0 2
        %2105 = vperm.xlu0 %2104, %v2072
        %v2106 = vpop.permute.xlu0 %2105
        %2109 = vset.pattern.permute.xlu0 2
        %2110 = vperm.xlu0 %2109, %v2073
        %v2111 = vpop.permute.xlu0 %2110
        %2114 = vset.pattern.permute.xlu0 2
        %2115 = vperm.xlu0 %2114, %v2074
        %v2116 = vpop.permute.xlu0 %2115
        %2119 = vset.pattern.permute.xlu0 2
        %2120 = vperm.xlu0 %2119, %v2075
        %v2121 = vpop.permute.xlu0 %2120
        %2124 = vset.pattern.permute.xlu0 2
        %2125 = vperm.xlu0 %2124, %v2076
        %v2126 = vpop.permute.xlu0 %2125
        %2129 = vset.pattern.permute.xlu0 2
        %2130 = vperm.xlu0 %2129, %v2077
        %v2131 = vpop.permute.xlu0 %2130
        %2134 = vset.pattern.permute.xlu0 2
        %2135 = vperm.xlu0 %2134, %v2078
        %v2136 = vpop.permute.xlu0 %2135
        %2139 = vset.pattern.permute.xlu0 2
        %2140 = vperm.xlu0 %2139, %v2079
        %v2141 = vpop.permute.xlu0 %2140
        %2144 = vset.pattern.permute.xlu0 2
        %2145 = vperm.xlu0 %2144, %v2080
        %v2146 = vpop.permute.xlu0 %2145
        %2149 = vset.pattern.permute.xlu0 2
        %2150 = vperm.xlu0 %2149, %v2081
        %v2151 = vpop.permute.xlu0 %2150
        %2154 = vset.pattern.permute.xlu0 2
        %2155 = vperm.xlu0 %2154, %v2082
        %v2156 = vpop.permute.xlu0 %2155
        %2159 = vset.pattern.permute.xlu0 2
        %2160 = vperm.xlu0 %2159, %v2083
        %v2161 = vpop.permute.xlu0 %2160
        %2164 = vset.pattern.permute.xlu0 2
        %2165 = vperm.xlu0 %2164, %v2084
        %v2166 = vpop.permute.xlu0 %2165
        %v2168 = vmul.f32 %v2091, %v2087
        %v2169 = vmul.f32 %v2096, %v2087
        %v2170 = vmul.f32 %v2101, %v2087
        %v2171 = vmul.f32 %v2106, %v2087
        %v2172 = vmul.f32 %v2111, %v2087
        %v2173 = vmul.f32 %v2116, %v2087
        %v2174 = vmul.f32 %v2121, %v2087
        %v2175 = vmul.f32 %v2126, %v2087
        %v2176 = vmul.f32 %v2131, %v2087
        %v2177 = vmul.f32 %v2136, %v2087
        %v2178 = vmul.f32 %v2141, %v2087
        %v2179 = vmul.f32 %v2146, %v2087
        %v2180 = vmul.f32 %v2151, %v2087
        %v2181 = vmul.f32 %v2156, %v2087
        %v2182 = vmul.f32 %v2161, %v2087
        %v2183 = vmul.f32 %v2166, %v2087
        %v2184 = vadd.f32 %v2037, %v2168
        %v2185 = vadd.f32 %v2038, %v2169
        %v2186 = vadd.f32 %v2039, %v2170
        %v2187 = vadd.f32 %v2040, %v2171
        %v2188 = vadd.f32 %v2041, %v2172
        %v2189 = vadd.f32 %v2042, %v2173
        %v2190 = vadd.f32 %v2043, %v2174
        %v2191 = vadd.f32 %v2044, %v2175
        %v2192 = vadd.f32 %v2045, %v2176
        %v2193 = vadd.f32 %v2046, %v2177
        %v2194 = vadd.f32 %v2047, %v2178
        %v2195 = vadd.f32 %v2048, %v2179
        %v2196 = vadd.f32 %v2049, %v2180
        %v2197 = vadd.f32 %v2050, %v2181
        %v2198 = vadd.f32 %v2051, %v2182
        %v2199 = vadd.f32 %v2052, %v2183
        %2200 = vst [vmem:[%s152] sm:$0xff] %v2184
        %2201 = vst [vmem:[%s152 + $0x8] sm:$0xff] %v2185
        %2202 = vst [vmem:[%s152 + $0x10] sm:$0xff] %v2186
        %2203 = vst [vmem:[%s152 + $0x18] sm:$0xff] %v2187
        %2204 = vst [vmem:[%s152 + $0x20] sm:$0xff] %v2188
        %2205 = vst [vmem:[%s152 + $0x28] sm:$0xff] %v2189
        %2206 = vst [vmem:[%s152 + $0x30] sm:$0xff] %v2190
        %2207 = vst [vmem:[%s152 + $0x38] sm:$0xff] %v2191
        %2208 = vst [vmem:[%s152 + $0x40] sm:$0xff] %v2192
        %2209 = vst [vmem:[%s152 + $0x48] sm:$0xff] %v2193
        %2210 = vst [vmem:[%s152 + $0x50] sm:$0xff] %v2194
        %2211 = vst [vmem:[%s152 + $0x58] sm:$0xff] %v2195
        %2212 = vst [vmem:[%s152 + $0x60] sm:$0xff] %v2196
        %2213 = vst [vmem:[%s152 + $0x68] sm:$0xff] %v2197
        %2214 = vst [vmem:[%s152 + $0x70] sm:$0xff] %v2198
        %2215 = vst [vmem:[%s152 + $0x78] sm:$0xff] %v2199
        %s2216 = sand.u32 %s72, 1
        %s2217 = scalar_lea.sflag [#allocation4], %s2216
        %s2218 = sand.u32 %s72, 1
        %s2219 = smul.addr %s2218, 128
        %s2220 = scalar_lea.vmem [#allocation5], %s2219
        // Predicated region
        $region33: #{tpu_custom_call.1} parent=27 // pred_check
          %p2221 = pneg %p82
        $region34: #{tpu_custom_call.1} parent=27 // pred_check_branch
          %2223 = sbr.rel (%p2221) target = $region36
        $region35: #{tpu_custom_call.1} parent=27 // pred_region
          %s2224 = smul.u32 16, %s17
          %s2226 = ssub.s32 2048, 2048
          %2227 = vsyncadd %s2217, %s2226
          %s2228 = smul.addr %s2224, 128
          %s2229 = scalar_lea.hbm %s2, %s2228
          %s2230 = sshll.u32 %s2220, 4
          %s2231 = int_to_ptr.vmem [resolvable:$true] %s2230
          %2236 = dma.vmem_to_hbm [thread:$0]  %s2231, 2048, %s2229, %s2217, 128, 128, 8
        $region36: #{tpu_custom_call.1} parent=27 // pred_fallthru
          _
      $region28: #{tpu_custom_call.1} parent=5 // pred_fallthru
        _
      %p2237 = scmp.le.s32.totalorder 2, %s12
      // Predicated region
      $region37: #{tpu_custom_call.1} parent=5 // pred_check
        %p2238 = pneg %p2237
      $region38: #{tpu_custom_call.1} parent=5 // pred_check_branch
        %2240 = sbr.rel (%p2238) target = $region40
      $region39: #{tpu_custom_call.1} parent=5 // pred_region
        %s2241 = ssub.s32 %s12, 2
        // Predicated region
        $region41: #{tpu_custom_call.1} parent=39 // pred_check
          %p2242 = pneg %p88
        $region42: #{tpu_custom_call.1} parent=39 // pred_check_branch
          %2244 = sbr.rel (%p2242) target = $region44
        $region43: #{tpu_custom_call.1} parent=39 // pred_region
          %s2245 = sand.u32 %s73, 1
          %s2246 = scalar_lea.sflag [#allocation4], %s2245
          %s2247 = sand.u32 %s73, 1
          %s2248 = smul.addr %s2247, 128
          %s2249 = scalar_lea.vmem [#allocation5], %s2248
          %2250 = dma.done %s2246, 2048
        $region44: #{tpu_custom_call.1} parent=39 // pred_fallthru
          _
      $region40: #{tpu_custom_call.1} parent=5 // pred_fallthru
        _
    $region6: #{tpu_custom_call.1} parent=1 // loop_footer
      %s16 = sadd.s32 1, %s12
    $region7: #{tpu_custom_call.1} parent=1 // loop_footer_branch
      %11 = sbr.rel target = $region3
    $region8: #{tpu_custom_call.1} parent=1 // loop_exit
      _
    %2251 = vsyncpa [#allocation3], 1
    %s2252 = scalar_lea.sflag [#allocation3], 1
    %2253 = vsyncpa %s2252, 1
    %2254 = vsyncpa [#allocation4], 1
    %s2255 = scalar_lea.sflag [#allocation4], 1
    %2256 = vsyncpa %s2255, 1

</llo_original>
